<compile_context>
chip_gen: v5e
topology: v5e:2x2
jax: 0.10.0
libtpu: 0.0.40
codegen_flags: <defaults>
</compile_context>

<pallas_src>
import functools

import jax
import jax.numpy as jnp
from jax import lax
from jax.experimental import pallas as pl
from jax.experimental.pallas import tpu as pltpu

# ----------------------------- config ---------------------------------------
CFG = dict(
    vocab_size=100,
    type_vocab_size=2,
    max_position=16,
    hidden=32,
    num_heads=2,
    intermediate=64,
    num_layers=2,
    num_class=3,        # W_hy output size (used by predict(), not forward())
)


# --------------------------- in-kernel helpers --------------------------------
def _gelu_tanh(x):
    # TODO(synk): HF BERT uses exact erf-based GELU; tanh approximation used here.
    c = 0.7978845608028654  # sqrt(2/pi)
    return 0.5 * x * (1.0 + jnp.tanh(c * (x + 0.044715 * x * x * x)))


def _layernorm(x, g, b):
    mu = jnp.mean(x, axis=-1, keepdims=True)
    var = jnp.mean(jnp.square(x - mu), axis=-1, keepdims=True)
    return (x - mu) * lax.rsqrt(var + 1e-12) * g + b


# --------------------------- fused encoder kernel -----------------------------
def _encoder_kernel(emb_ref, mask_ref, eg_ref, eb_ref,
                    qkv_w_ref, qkv_b_ref, o_w_ref, o_b_ref,
                    ln1_g_ref, ln1_b_ref, i_w_ref, i_b_ref,
                    out_w_ref, out_b_ref, ln2_g_ref, ln2_b_ref,
                    h_ref, ctx_ref, *, B, L, nh, scale, num_layers):
    """Single invocation: embedding LN + all transformer layers.

    emb_ref  : (B*L, H) f32     summed embeddings
    mask_ref : (B, 1, L) f32    additive key-mask bias
    weights  : stacked with leading layer axis; big matmul weights are bf16
    h_ref    : (B*L, H) f32     output (last hidden states)
    ctx_ref  : (B*L, H) f32     VMEM scratch for the per-head attention context
    """
    H = h_ref.shape[-1]
    dh = H // nh

    # ---- embedding LayerNorm (f32 on the VPU) ----
    h0 = _layernorm(emb_ref[...], eg_ref[...], eb_ref[...])            # (B*L, H)

    def layer(l, h):
        # Fused QKV projection: one (B*L,H) x (H,3H) bf16 MXU matmul, f32 acc.
        qkv = jnp.dot(h.astype(jnp.bfloat16), qkv_w_ref[l],
                      preferred_element_type=jnp.float32) + qkv_b_ref[l]   # (B*L, 3H)

        # Per-(batch, head) attention.  Each head's context goes into its lane
        # slice of ctx_ref so the output projection is ONE K=H matmul below.
        for b in range(B):                 # B, nh tiny -> unrolled at trace time
            row = b * L
            mask = mask_ref[b]                                          # (1, L)
            blk = qkv[row:row + L]                                      # (L, 3H)
            for hd in range(nh):
                qh = blk[:, hd * dh:(hd + 1) * dh]                      # (L, dh)
                kh = blk[:, H + hd * dh:H + (hd + 1) * dh]              # (L, dh)
                vh = blk[:, 2 * H + hd * dh:2 * H + (hd + 1) * dh]      # (L, dh)
                # scores = q @ k^T (contract last dims; no explicit transpose)
                s = lax.dot_general(qh, kh, (((1,), (1,)), ((), ())),
                                    preferred_element_type=jnp.float32)
                s = s * scale + mask                                    # f32 mask add
                s = s - jnp.max(s, axis=-1, keepdims=True)
                p = jnp.exp(s)
                p = p * pl.reciprocal(jnp.sum(p, axis=-1, keepdims=True),
                                      approx=False)
                ctx = jnp.dot(p.astype(jnp.bfloat16), vh.astype(jnp.bfloat16),
                              preferred_element_type=jnp.float32)       # (L, dh)
                ctx_ref[row:row + L, hd * dh:(hd + 1) * dh] = ctx

        # Single output projection over all heads: (B*L,H) x (H,H).
        attn = jnp.dot(ctx_ref[...].astype(jnp.bfloat16), o_w_ref[l],
                       preferred_element_type=jnp.float32) + o_b_ref[l]

        # residual + LN1
        h1 = _layernorm(attn + h, ln1_g_ref[l], ln1_b_ref[l])

        # FFN (GELU) + residual + LN2; intermediate stays in vregs/VMEM.
        inter = _gelu_tanh(
            jnp.dot(h1.astype(jnp.bfloat16), i_w_ref[l],
                    preferred_element_type=jnp.float32) + i_b_ref[l])
        ffn = jnp.dot(inter.astype(jnp.bfloat16), out_w_ref[l],
                      preferred_element_type=jnp.float32) + out_b_ref[l]
        return _layernorm(ffn + h1, ln2_g_ref[l], ln2_b_ref[l])

    h_ref[...] = lax.fori_loop(0, num_layers, layer, h0, unroll=True)


def encoder_pallas(emb, mask_bias, params, cfg):
    """Run the full fused encoder.  emb:(B*L,H), mask_bias:(B,1,L) -> (B*L,H)."""
    H = cfg["hidden"]
    NL = cfg["num_layers"]
    nh = cfg["num_heads"]
    B = mask_bias.shape[0]
    L = mask_bias.shape[-1]
    assert H % nh == 0
    dh = H // nh
    scale = 1.0 / float(dh) ** 0.5

    kernel = functools.partial(_encoder_kernel, B=B, L=L, nh=nh, scale=scale,
                               num_layers=NL)
    # No grid: everything (weights + activations, ~60 KB) fits in VMEM, so the
    # whole encoder runs as a single step with zero pipeline bookkeeping.
    return pl.pallas_call(
        kernel,
        out_shape=jax.ShapeDtypeStruct((B * L, H), jnp.float32),
        scratch_shapes=[pltpu.VMEM((B * L, H), jnp.float32)],   # ctx scratch
    )(emb, mask_bias,
      params["emb_ln_g"], params["emb_ln_b"],
      params["qkv_w"], params["qkv_b"], params["o_w"], params["o_b"],
      params["ln1_g"], params["ln1_b"], params["i_w"], params["i_b"],
      params["out_w"], params["out_b"], params["ln2_g"], params["ln2_b"])


# ----------------------- synthetic BERT parameters ---------------------------
def init_params(key, cfg):
    """Deterministic synthetic BERT params, pre-stacked for the fused kernel."""
    H, I, NL = cfg["hidden"], cfg["intermediate"], cfg["num_layers"]

    def nrm(k, shape, scale=0.02):
        return scale * jax.random.normal(k, shape, dtype=jnp.float32)

    keys = iter(jax.random.split(key, 32))
    params = dict(
        word_emb=nrm(next(keys), (cfg["vocab_size"], H)),
        type_emb=nrm(next(keys), (cfg["type_vocab_size"], H)),
        pos_emb=nrm(next(keys), (cfg["max_position"], H)),
        emb_ln_g=jnp.ones((1, H), jnp.float32),
        emb_ln_b=jnp.zeros((1, H), jnp.float32),
        # per-layer weights stacked with a leading layer axis; MXU weights bf16
        qkv_w=nrm(next(keys), (NL, H, 3 * H)).astype(jnp.bfloat16),
        qkv_b=jnp.zeros((NL, 1, 3 * H), jnp.float32),
        o_w=nrm(next(keys), (NL, H, H)).astype(jnp.bfloat16),
        o_b=jnp.zeros((NL, 1, H), jnp.float32),
        ln1_g=jnp.ones((NL, 1, H), jnp.float32),
        ln1_b=jnp.zeros((NL, 1, H), jnp.float32),
        i_w=nrm(next(keys), (NL, H, I)).astype(jnp.bfloat16),
        i_b=jnp.zeros((NL, 1, I), jnp.float32),
        out_w=nrm(next(keys), (NL, I, H)).astype(jnp.bfloat16),
        out_b=jnp.zeros((NL, 1, H), jnp.float32),
        ln2_g=jnp.ones((NL, 1, H), jnp.float32),
        ln2_b=jnp.zeros((NL, 1, H), jnp.float32),
        # classifier head (predict())
        W_hy_w=nrm(next(keys), (H, cfg["num_class"])),
        W_hy_b=jnp.zeros((cfg["num_class"],), jnp.float32),
    )
    return params


# ----------------------------- model forward ---------------------------------
def bbqq_forward(X, params, cfg=CFG):
    """Equivalent of bbqqClassifer.forward: returns H_all = bert(...)[0], (B,L,H)."""
    input_ids = X[:, 0]        # (B, L)
    token_type_ids = X[:, 1]   # (B, L)
    attention_mask = X[:, 2]   # (B, L)
    B, L = input_ids.shape
    H = cfg["hidden"]
    assert L <= cfg["max_position"], "sequence length exceeds max_position embeddings"

    # Embedding gathers stay in XLA glue (tiny); everything downstream is fused.
    we = jnp.take(params["word_emb"], input_ids, axis=0)       # (B, L, H)
    te = jnp.take(params["type_emb"], token_type_ids, axis=0)  # (B, L, H)
    pe = params["pos_emb"][:L][None, :, :]                     # (1, L, H)
    emb = (we + te + pe).reshape(B * L, H)

    # Additive attention-mask bias over key positions: (B, 1, L), kept in f32.
    mask_bias = ((1.0 - attention_mask.astype(jnp.float32)) * -1e9)[:, None, :]

    h = encoder_pallas(emb, mask_bias, params, cfg)            # (B*L, H)
    return h.reshape(B, L, H)  # H_all


def bbqq_predict(X, params, cfg=CFG):
    """Equivalent of bbqqClassifer.predict: y_hat = W_hy(H_all[:, 0, :])."""
    H_all = bbqq_forward(X, params, cfg)
    H_cls = H_all[:, 0, :]                                     # (B, H)
    # (2,32)x(32,3) is far below TPU tile granularity -> plain XLA dot.
    return jnp.dot(H_cls, params["W_hy_w"]) + params["W_hy_b"]


# --------------------------------- main ---------------------------------------
if __name__ == "__main__":
    key = jax.random.PRNGKey(0)
    k_par, k_ids, k_typ = jax.random.split(key, 3)

    B, L = 2, 8
    params = init_params(k_par, CFG)

    input_ids = jax.random.randint(k_ids, (B, L), 0, CFG["vocab_size"], dtype=jnp.int32)
    token_type_ids = jax.random.randint(k_typ, (B, L), 0, CFG["type_vocab_size"], dtype=jnp.int32)
    attention_mask = jnp.ones((B, L), dtype=jnp.int32).at[1, L - 2:].set(0)  # pad tail of batch 1

    X = jnp.stack([input_ids, token_type_ids, attention_mask], axis=1)  # (B, 3, L) int32

    fwd = jax.jit(bbqq_forward)
    H_all = fwd(X, params)
    jax.block_until_ready(H_all)
    assert H_all.shape == (B, L, CFG["hidden"]) and H_all.dtype == jnp.float32

    print("KERNEL_OK")
</pallas_src>

<mosaic_0001>
module attributes {stable_mosaic.version = 11 : i64} {
  func.func @_encoder_kernel(%arg0: memref<16x32xf32, #tpu.memory_space<vmem>>, %arg1: memref<2x1x8xf32, #tpu.memory_space<vmem>>, %arg2: memref<1x32xf32, #tpu.memory_space<vmem>>, %arg3: memref<1x32xf32, #tpu.memory_space<vmem>>, %arg4: memref<2x32x96xbf16, #tpu.memory_space<vmem>>, %arg5: memref<2x1x96xf32, #tpu.memory_space<vmem>>, %arg6: memref<2x32x32xbf16, #tpu.memory_space<vmem>>, %arg7: memref<2x1x32xf32, #tpu.memory_space<vmem>>, %arg8: memref<2x1x32xf32, #tpu.memory_space<vmem>>, %arg9: memref<2x1x32xf32, #tpu.memory_space<vmem>>, %arg10: memref<2x32x64xbf16, #tpu.memory_space<vmem>>, %arg11: memref<2x1x64xf32, #tpu.memory_space<vmem>>, %arg12: memref<2x64x32xbf16, #tpu.memory_space<vmem>>, %arg13: memref<2x1x32xf32, #tpu.memory_space<vmem>>, %arg14: memref<2x1x32xf32, #tpu.memory_space<vmem>>, %arg15: memref<2x1x32xf32, #tpu.memory_space<vmem>>, %arg16: memref<16x32xf32, #tpu.memory_space<vmem>>, %arg17: memref<16x32xf32, #tpu.memory_space<vmem>>) attributes {dimension_semantics = [], scalar_prefetch = 0 : i64, scratch_operands = 1 : i64, tpu.core_type = #tpu.core_type<tc>} {
    %c0 = arith.constant 0 : index
    %c0_0 = arith.constant 0 : index
    %0 = vector.load %arg0[%c0, %c0_0] : memref<16x32xf32, #tpu.memory_space<vmem>>, vector<16x32xf32>
    %c0_1 = arith.constant 0 : index
    %c0_2 = arith.constant 0 : index
    %1 = vector.load %arg2[%c0_1, %c0_2] : memref<1x32xf32, #tpu.memory_space<vmem>>, vector<1x32xf32>
    %c0_3 = arith.constant 0 : index
    %c0_4 = arith.constant 0 : index
    %2 = vector.load %arg3[%c0_3, %c0_4] : memref<1x32xf32, #tpu.memory_space<vmem>>, vector<1x32xf32>
    %cst = arith.constant dense<0.000000e+00> : vector<16xf32>
    %3 = vector.multi_reduction <add>, %0, %cst [1] : vector<16x32xf32> to vector<16xf32>
    %4 = vector.shape_cast %3 : vector<16xf32> to vector<16x1xf32>
    %cst_5 = arith.constant 3.200000e+01 : f32
    %5 = vector.broadcast %cst_5 : f32 to vector<16x1xf32>
    %6 = arith.divf %4, %5 : vector<16x1xf32>
    %7 = vector.broadcast %6 : vector<16x1xf32> to vector<16x32xf32>
    %8 = arith.subf %0, %7 : vector<16x32xf32>
    %9 = arith.mulf %8, %8 : vector<16x32xf32>
    %cst_6 = arith.constant dense<0.000000e+00> : vector<16xf32>
    %10 = vector.multi_reduction <add>, %9, %cst_6 [1] : vector<16x32xf32> to vector<16xf32>
    %11 = vector.shape_cast %10 : vector<16xf32> to vector<16x1xf32>
    %cst_7 = arith.constant 3.200000e+01 : f32
    %12 = vector.broadcast %cst_7 : f32 to vector<16x1xf32>
    %13 = arith.divf %11, %12 : vector<16x1xf32>
    %14 = vector.broadcast %6 : vector<16x1xf32> to vector<16x32xf32>
    %15 = arith.subf %0, %14 : vector<16x32xf32>
    %cst_8 = arith.constant 9.99999996E-13 : f32
    %16 = vector.broadcast %cst_8 : f32 to vector<16x1xf32>
    %17 = arith.addf %13, %16 : vector<16x1xf32>
    %18 = math.rsqrt %17 : vector<16x1xf32>
    %19 = vector.broadcast %18 : vector<16x1xf32> to vector<16x32xf32>
    %20 = arith.mulf %15, %19 : vector<16x32xf32>
    %21 = vector.broadcast %1 : vector<1x32xf32> to vector<16x32xf32>
    %22 = arith.mulf %20, %21 : vector<16x32xf32>
    %23 = vector.broadcast %2 : vector<1x32xf32> to vector<16x32xf32>
    %24 = arith.addf %22, %23 : vector<16x32xf32>
    %c0_i32 = arith.constant 0 : i32
    %25 = arith.truncf %24 : vector<16x32xf32> to vector<16x32xbf16>
    %26 = arith.index_cast %c0_i32 : i32 to index
    %c0_9 = arith.constant 0 : index
    %c0_10 = arith.constant 0 : index
    %27 = vector.load %arg4[%26, %c0_9, %c0_10] : memref<2x32x96xbf16, #tpu.memory_space<vmem>>, vector<1x32x96xbf16>
    %28 = vector.shape_cast %27 : vector<1x32x96xbf16> to vector<32x96xbf16>
    %cst_11 = arith.constant dense<0.000000e+00> : vector<16x96xf32>
    %29 = tpu.matmul %25, %28, %cst_11 {dimension_numbers = #tpu.dot_dimension_numbers<[1], [0], [0], [1], [0, 0, 1, 1], [], []>} : vector<16x32xbf16>, vector<32x96xbf16>, vector<16x96xf32> -> vector<16x96xf32>
    %30 = arith.index_cast %c0_i32 : i32 to index
    %c0_12 = arith.constant 0 : index
    %c0_13 = arith.constant 0 : index
    %31 = vector.load %arg5[%30, %c0_12, %c0_13] : memref<2x1x96xf32, #tpu.memory_space<vmem>>, vector<1x1x96xf32>
    %32 = vector.shape_cast %31 : vector<1x1x96xf32> to vector<1x96xf32>
    %33 = vector.broadcast %32 : vector<1x96xf32> to vector<16x96xf32>
    %34 = arith.addf %29, %33 : vector<16x96xf32>
    %c0_14 = arith.constant 0 : index
    %c0_15 = arith.constant 0 : index
    %c0_16 = arith.constant 0 : index
    %35 = vector.load %arg1[%c0_14, %c0_15, %c0_16] : memref<2x1x8xf32, #tpu.memory_space<vmem>>, vector<1x1x8xf32>
    %36 = vector.shape_cast %35 : vector<1x1x8xf32> to vector<1x8xf32>
    %37 = vector.extract_strided_slice %34 {offsets = [0, 0], sizes = [8, 96], strides = [1, 1]} : vector<16x96xf32> to vector<8x96xf32>
    %38 = vector.extract_strided_slice %37 {offsets = [0, 0], sizes = [8, 16], strides = [1, 1]} : vector<8x96xf32> to vector<8x16xf32>
    %39 = vector.extract_strided_slice %37 {offsets = [0, 32], sizes = [8, 16], strides = [1, 1]} : vector<8x96xf32> to vector<8x16xf32>
    %40 = vector.extract_strided_slice %37 {offsets = [0, 64], sizes = [8, 16], strides = [1, 1]} : vector<8x96xf32> to vector<8x16xf32>
    %cst_17 = arith.constant dense<0.000000e+00> : vector<8x8xf32>
    %41 = tpu.matmul %38, %39, %cst_17 {dimension_numbers = #tpu.dot_dimension_numbers<[1], [1], [0], [0], [0, 0, 1, 0], [], []>} : vector<8x16xf32>, vector<8x16xf32>, vector<8x8xf32> -> vector<8x8xf32>
    %cst_18 = arith.constant 2.500000e-01 : f32
    %42 = vector.broadcast %cst_18 : f32 to vector<8x8xf32>
    %43 = arith.mulf %41, %42 : vector<8x8xf32>
    %44 = vector.broadcast %36 : vector<1x8xf32> to vector<8x8xf32>
    %45 = arith.addf %43, %44 : vector<8x8xf32>
    %cst_19 = arith.constant dense<0xFF800000> : vector<8xf32>
    %46 = vector.multi_reduction <maximumf>, %45, %cst_19 [1] : vector<8x8xf32> to vector<8xf32>
    %47 = vector.shape_cast %46 : vector<8xf32> to vector<8x1xf32>
    %48 = vector.broadcast %47 : vector<8x1xf32> to vector<8x8xf32>
    %49 = arith.subf %45, %48 : vector<8x8xf32>
    %50 = math.exp %49 : vector<8x8xf32>
    %cst_20 = arith.constant dense<0.000000e+00> : vector<8xf32>
    %51 = vector.multi_reduction <add>, %50, %cst_20 [1] : vector<8x8xf32> to vector<8xf32>
    %52 = vector.shape_cast %51 : vector<8xf32> to vector<8x1xf32>
    %53 = tpu.reciprocal %52 : vector<8x1xf32> -> vector<8x1xf32>
    %54 = vector.broadcast %53 : vector<8x1xf32> to vector<8x8xf32>
    %55 = arith.mulf %50, %54 : vector<8x8xf32>
    %56 = arith.truncf %55 : vector<8x8xf32> to vector<8x8xbf16>
    %57 = arith.truncf %40 : vector<8x16xf32> to vector<8x16xbf16>
    %cst_21 = arith.constant dense<0.000000e+00> : vector<8x16xf32>
    %58 = tpu.matmul %56, %57, %cst_21 {dimension_numbers = #tpu.dot_dimension_numbers<[1], [0], [0], [1], [0, 0, 1, 1], [], []>} : vector<8x8xbf16>, vector<8x16xbf16>, vector<8x16xf32> -> vector<8x16xf32>
    %c0_22 = arith.constant 0 : index
    %c0_23 = arith.constant 0 : index
    %59 = vector.load %arg17[%c0_22, %c0_23] : memref<16x32xf32, #tpu.memory_space<vmem>>, vector<8x16xf32>
    tpu.vector_store %arg17[%c0_22, %c0_23], %58 {strides = array<i32>} : memref<16x32xf32, #tpu.memory_space<vmem>>, vector<8x16xf32>,
    %60 = vector.extract_strided_slice %37 {offsets = [0, 16], sizes = [8, 16], strides = [1, 1]} : vector<8x96xf32> to vector<8x16xf32>
    %61 = vector.extract_strided_slice %37 {offsets = [0, 48], sizes = [8, 16], strides = [1, 1]} : vector<8x96xf32> to vector<8x16xf32>
    %62 = vector.extract_strided_slice %37 {offsets = [0, 80], sizes = [8, 16], strides = [1, 1]} : vector<8x96xf32> to vector<8x16xf32>
    %cst_24 = arith.constant dense<0.000000e+00> : vector<8x8xf32>
    %63 = tpu.matmul %60, %61, %cst_24 {dimension_numbers = #tpu.dot_dimension_numbers<[1], [1], [0], [0], [0, 0, 1, 0], [], []>} : vector<8x16xf32>, vector<8x16xf32>, vector<8x8xf32> -> vector<8x8xf32>
    %cst_25 = arith.constant 2.500000e-01 : f32
    %64 = vector.broadcast %cst_25 : f32 to vector<8x8xf32>
    %65 = arith.mulf %63, %64 : vector<8x8xf32>
    %66 = vector.broadcast %36 : vector<1x8xf32> to vector<8x8xf32>
    %67 = arith.addf %65, %66 : vector<8x8xf32>
    %cst_26 = arith.constant dense<0xFF800000> : vector<8xf32>
    %68 = vector.multi_reduction <maximumf>, %67, %cst_26 [1] : vector<8x8xf32> to vector<8xf32>
    %69 = vector.shape_cast %68 : vector<8xf32> to vector<8x1xf32>
    %70 = vector.broadcast %69 : vector<8x1xf32> to vector<8x8xf32>
    %71 = arith.subf %67, %70 : vector<8x8xf32>
    %72 = math.exp %71 : vector<8x8xf32>
    %cst_27 = arith.constant dense<0.000000e+00> : vector<8xf32>
    %73 = vector.multi_reduction <add>, %72, %cst_27 [1] : vector<8x8xf32> to vector<8xf32>
    %74 = vector.shape_cast %73 : vector<8xf32> to vector<8x1xf32>
    %75 = tpu.reciprocal %74 : vector<8x1xf32> -> vector<8x1xf32>
    %76 = vector.broadcast %75 : vector<8x1xf32> to vector<8x8xf32>
    %77 = arith.mulf %72, %76 : vector<8x8xf32>
    %78 = arith.truncf %77 : vector<8x8xf32> to vector<8x8xbf16>
    %79 = arith.truncf %62 : vector<8x16xf32> to vector<8x16xbf16>
    %cst_28 = arith.constant dense<0.000000e+00> : vector<8x16xf32>
    %80 = tpu.matmul %78, %79, %cst_28 {dimension_numbers = #tpu.dot_dimension_numbers<[1], [0], [0], [1], [0, 0, 1, 1], [], []>} : vector<8x8xbf16>, vector<8x16xbf16>, vector<8x16xf32> -> vector<8x16xf32>
    %c0_29 = arith.constant 0 : index
    %c16 = arith.constant 16 : index
    %81 = vector.load %arg17[%c0_29, %c16] : memref<16x32xf32, #tpu.memory_space<vmem>>, vector<8x16xf32>
    tpu.vector_store %arg17[%c0_29, %c16], %80 {strides = array<i32>} : memref<16x32xf32, #tpu.memory_space<vmem>>, vector<8x16xf32>,
    %c1 = arith.constant 1 : index
    %c0_30 = arith.constant 0 : index
    %c0_31 = arith.constant 0 : index
    %82 = vector.load %arg1[%c1, %c0_30, %c0_31] : memref<2x1x8xf32, #tpu.memory_space<vmem>>, vector<1x1x8xf32>
    %83 = vector.shape_cast %82 : vector<1x1x8xf32> to vector<1x8xf32>
    %84 = vector.extract_strided_slice %34 {offsets = [8, 0], sizes = [8, 96], strides = [1, 1]} : vector<16x96xf32> to vector<8x96xf32>
    %85 = vector.extract_strided_slice %84 {offsets = [0, 0], sizes = [8, 16], strides = [1, 1]} : vector<8x96xf32> to vector<8x16xf32>
    %86 = vector.extract_strided_slice %84 {offsets = [0, 32], sizes = [8, 16], strides = [1, 1]} : vector<8x96xf32> to vector<8x16xf32>
    %87 = vector.extract_strided_slice %84 {offsets = [0, 64], sizes = [8, 16], strides = [1, 1]} : vector<8x96xf32> to vector<8x16xf32>
    %cst_32 = arith.constant dense<0.000000e+00> : vector<8x8xf32>
    %88 = tpu.matmul %85, %86, %cst_32 {dimension_numbers = #tpu.dot_dimension_numbers<[1], [1], [0], [0], [0, 0, 1, 0], [], []>} : vector<8x16xf32>, vector<8x16xf32>, vector<8x8xf32> -> vector<8x8xf32>
    %cst_33 = arith.constant 2.500000e-01 : f32
    %89 = vector.broadcast %cst_33 : f32 to vector<8x8xf32>
    %90 = arith.mulf %88, %89 : vector<8x8xf32>
    %91 = vector.broadcast %83 : vector<1x8xf32> to vector<8x8xf32>
    %92 = arith.addf %90, %91 : vector<8x8xf32>
    %cst_34 = arith.constant dense<0xFF800000> : vector<8xf32>
    %93 = vector.multi_reduction <maximumf>, %92, %cst_34 [1] : vector<8x8xf32> to vector<8xf32>
    %94 = vector.shape_cast %93 : vector<8xf32> to vector<8x1xf32>
    %95 = vector.broadcast %94 : vector<8x1xf32> to vector<8x8xf32>
    %96 = arith.subf %92, %95 : vector<8x8xf32>
    %97 = math.exp %96 : vector<8x8xf32>
    %cst_35 = arith.constant dense<0.000000e+00> : vector<8xf32>
    %98 = vector.multi_reduction <add>, %97, %cst_35 [1] : vector<8x8xf32> to vector<8xf32>
    %99 = vector.shape_cast %98 : vector<8xf32> to vector<8x1xf32>
    %100 = tpu.reciprocal %99 : vector<8x1xf32> -> vector<8x1xf32>
    %101 = vector.broadcast %100 : vector<8x1xf32> to vector<8x8xf32>
    %102 = arith.mulf %97, %101 : vector<8x8xf32>
    %103 = arith.truncf %102 : vector<8x8xf32> to vector<8x8xbf16>
    %104 = arith.truncf %87 : vector<8x16xf32> to vector<8x16xbf16>
    %cst_36 = arith.constant dense<0.000000e+00> : vector<8x16xf32>
    %105 = tpu.matmul %103, %104, %cst_36 {dimension_numbers = #tpu.dot_dimension_numbers<[1], [0], [0], [1], [0, 0, 1, 1], [], []>} : vector<8x8xbf16>, vector<8x16xbf16>, vector<8x16xf32> -> vector<8x16xf32>
    %c8 = arith.constant 8 : index
    %c0_37 = arith.constant 0 : index
    %106 = vector.load %arg17[%c8, %c0_37] : memref<16x32xf32, #tpu.memory_space<vmem>>, vector<8x16xf32>
    tpu.vector_store %arg17[%c8, %c0_37], %105 {strides = array<i32>} : memref<16x32xf32, #tpu.memory_space<vmem>>, vector<8x16xf32>,
    %107 = vector.extract_strided_slice %84 {offsets = [0, 16], sizes = [8, 16], strides = [1, 1]} : vector<8x96xf32> to vector<8x16xf32>
    %108 = vector.extract_strided_slice %84 {offsets = [0, 48], sizes = [8, 16], strides = [1, 1]} : vector<8x96xf32> to vector<8x16xf32>
    %109 = vector.extract_strided_slice %84 {offsets = [0, 80], sizes = [8, 16], strides = [1, 1]} : vector<8x96xf32> to vector<8x16xf32>
    %cst_38 = arith.constant dense<0.000000e+00> : vector<8x8xf32>
    %110 = tpu.matmul %107, %108, %cst_38 {dimension_numbers = #tpu.dot_dimension_numbers<[1], [1], [0], [0], [0, 0, 1, 0], [], []>} : vector<8x16xf32>, vector<8x16xf32>, vector<8x8xf32> -> vector<8x8xf32>
    %cst_39 = arith.constant 2.500000e-01 : f32
    %111 = vector.broadcast %cst_39 : f32 to vector<8x8xf32>
    %112 = arith.mulf %110, %111 : vector<8x8xf32>
    %113 = vector.broadcast %83 : vector<1x8xf32> to vector<8x8xf32>
    %114 = arith.addf %112, %113 : vector<8x8xf32>
    %cst_40 = arith.constant dense<0xFF800000> : vector<8xf32>
    %115 = vector.multi_reduction <maximumf>, %114, %cst_40 [1] : vector<8x8xf32> to vector<8xf32>
    %116 = vector.shape_cast %115 : vector<8xf32> to vector<8x1xf32>
    %117 = vector.broadcast %116 : vector<8x1xf32> to vector<8x8xf32>
    %118 = arith.subf %114, %117 : vector<8x8xf32>
    %119 = math.exp %118 : vector<8x8xf32>
    %cst_41 = arith.constant dense<0.000000e+00> : vector<8xf32>
    %120 = vector.multi_reduction <add>, %119, %cst_41 [1] : vector<8x8xf32> to vector<8xf32>
    %121 = vector.shape_cast %120 : vector<8xf32> to vector<8x1xf32>
    %122 = tpu.reciprocal %121 : vector<8x1xf32> -> vector<8x1xf32>
    %123 = vector.broadcast %122 : vector<8x1xf32> to vector<8x8xf32>
    %124 = arith.mulf %119, %123 : vector<8x8xf32>
    %125 = arith.truncf %124 : vector<8x8xf32> to vector<8x8xbf16>
    %126 = arith.truncf %109 : vector<8x16xf32> to vector<8x16xbf16>
    %cst_42 = arith.constant dense<0.000000e+00> : vector<8x16xf32>
    %127 = tpu.matmul %125, %126, %cst_42 {dimension_numbers = #tpu.dot_dimension_numbers<[1], [0], [0], [1], [0, 0, 1, 1], [], []>} : vector<8x8xbf16>, vector<8x16xbf16>, vector<8x16xf32> -> vector<8x16xf32>
    %c8_43 = arith.constant 8 : index
    %c16_44 = arith.constant 16 : index
    %128 = vector.load %arg17[%c8_43, %c16_44] : memref<16x32xf32, #tpu.memory_space<vmem>>, vector<8x16xf32>
    tpu.vector_store %arg17[%c8_43, %c16_44], %127 {strides = array<i32>} : memref<16x32xf32, #tpu.memory_space<vmem>>, vector<8x16xf32>,
    %c0_45 = arith.constant 0 : index
    %c0_46 = arith.constant 0 : index
    %129 = vector.load %arg17[%c0_45, %c0_46] : memref<16x32xf32, #tpu.memory_space<vmem>>, vector<16x32xf32>
    %130 = arith.truncf %129 : vector<16x32xf32> to vector<16x32xbf16>
    %131 = arith.index_cast %c0_i32 : i32 to index
    %c0_47 = arith.constant 0 : index
    %c0_48 = arith.constant 0 : index
    %132 = vector.load %arg6[%131, %c0_47, %c0_48] : memref<2x32x32xbf16, #tpu.memory_space<vmem>>, vector<1x32x32xbf16>
    %133 = vector.shape_cast %132 : vector<1x32x32xbf16> to vector<32x32xbf16>
    %cst_49 = arith.constant dense<0.000000e+00> : vector<16x32xf32>
    %134 = tpu.matmul %130, %133, %cst_49 {dimension_numbers = #tpu.dot_dimension_numbers<[1], [0], [0], [1], [0, 0, 1, 1], [], []>} : vector<16x32xbf16>, vector<32x32xbf16>, vector<16x32xf32> -> vector<16x32xf32>
    %135 = arith.index_cast %c0_i32 : i32 to index
    %c0_50 = arith.constant 0 : index
    %c0_51 = arith.constant 0 : index
    %136 = vector.load %arg7[%135, %c0_50, %c0_51] : memref<2x1x32xf32, #tpu.memory_space<vmem>>, vector<1x1x32xf32>
    %137 = vector.shape_cast %136 : vector<1x1x32xf32> to vector<1x32xf32>
    %138 = vector.broadcast %137 : vector<1x32xf32> to vector<16x32xf32>
    %139 = arith.addf %134, %138 : vector<16x32xf32>
    %140 = arith.addf %139, %24 : vector<16x32xf32>
    %141 = arith.index_cast %c0_i32 : i32 to index
    %c0_52 = arith.constant 0 : index
    %c0_53 = arith.constant 0 : index
    %142 = vector.load %arg8[%141, %c0_52, %c0_53] : memref<2x1x32xf32, #tpu.memory_space<vmem>>, vector<1x1x32xf32>
    %143 = vector.shape_cast %142 : vector<1x1x32xf32> to vector<1x32xf32>
    %144 = arith.index_cast %c0_i32 : i32 to index
    %c0_54 = arith.constant 0 : index
    %c0_55 = arith.constant 0 : index
    %145 = vector.load %arg9[%144, %c0_54, %c0_55] : memref<2x1x32xf32, #tpu.memory_space<vmem>>, vector<1x1x32xf32>
    %146 = vector.shape_cast %145 : vector<1x1x32xf32> to vector<1x32xf32>
    %cst_56 = arith.constant dense<0.000000e+00> : vector<16xf32>
    %147 = vector.multi_reduction <add>, %140, %cst_56 [1] : vector<16x32xf32> to vector<16xf32>
    %148 = vector.shape_cast %147 : vector<16xf32> to vector<16x1xf32>
    %cst_57 = arith.constant 3.200000e+01 : f32
    %149 = vector.broadcast %cst_57 : f32 to vector<16x1xf32>
    %150 = arith.divf %148, %149 : vector<16x1xf32>
    %151 = vector.broadcast %150 : vector<16x1xf32> to vector<16x32xf32>
    %152 = arith.subf %140, %151 : vector<16x32xf32>
    %153 = arith.mulf %152, %152 : vector<16x32xf32>
    %cst_58 = arith.constant dense<0.000000e+00> : vector<16xf32>
    %154 = vector.multi_reduction <add>, %153, %cst_58 [1] : vector<16x32xf32> to vector<16xf32>
    %155 = vector.shape_cast %154 : vector<16xf32> to vector<16x1xf32>
    %cst_59 = arith.constant 3.200000e+01 : f32
    %156 = vector.broadcast %cst_59 : f32 to vector<16x1xf32>
    %157 = arith.divf %155, %156 : vector<16x1xf32>
    %158 = vector.broadcast %150 : vector<16x1xf32> to vector<16x32xf32>
    %159 = arith.subf %140, %158 : vector<16x32xf32>
    %cst_60 = arith.constant 9.99999996E-13 : f32
    %160 = vector.broadcast %cst_60 : f32 to vector<16x1xf32>
    %161 = arith.addf %157, %160 : vector<16x1xf32>
    %162 = math.rsqrt %161 : vector<16x1xf32>
    %163 = vector.broadcast %162 : vector<16x1xf32> to vector<16x32xf32>
    %164 = arith.mulf %159, %163 : vector<16x32xf32>
    %165 = vector.broadcast %143 : vector<1x32xf32> to vector<16x32xf32>
    %166 = arith.mulf %164, %165 : vector<16x32xf32>
    %167 = vector.broadcast %146 : vector<1x32xf32> to vector<16x32xf32>
    %168 = arith.addf %166, %167 : vector<16x32xf32>
    %169 = arith.truncf %168 : vector<16x32xf32> to vector<16x32xbf16>
    %170 = arith.index_cast %c0_i32 : i32 to index
    %c0_61 = arith.constant 0 : index
    %c0_62 = arith.constant 0 : index
    %171 = vector.load %arg10[%170, %c0_61, %c0_62] : memref<2x32x64xbf16, #tpu.memory_space<vmem>>, vector<1x32x64xbf16>
    %172 = vector.shape_cast %171 : vector<1x32x64xbf16> to vector<32x64xbf16>
    %cst_63 = arith.constant dense<0.000000e+00> : vector<16x64xf32>
    %173 = tpu.matmul %169, %172, %cst_63 {dimension_numbers = #tpu.dot_dimension_numbers<[1], [0], [0], [1], [0, 0, 1, 1], [], []>} : vector<16x32xbf16>, vector<32x64xbf16>, vector<16x64xf32> -> vector<16x64xf32>
    %174 = arith.index_cast %c0_i32 : i32 to index
    %c0_64 = arith.constant 0 : index
    %c0_65 = arith.constant 0 : index
    %175 = vector.load %arg11[%174, %c0_64, %c0_65] : memref<2x1x64xf32, #tpu.memory_space<vmem>>, vector<1x1x64xf32>
    %176 = vector.shape_cast %175 : vector<1x1x64xf32> to vector<1x64xf32>
    %177 = vector.broadcast %176 : vector<1x64xf32> to vector<16x64xf32>
    %178 = arith.addf %173, %177 : vector<16x64xf32>
    %cst_66 = arith.constant 5.000000e-01 : f32
    %179 = vector.broadcast %cst_66 : f32 to vector<16x64xf32>
    %180 = arith.mulf %179, %178 : vector<16x64xf32>
    %cst_67 = arith.constant 4.471500e-02 : f32
    %181 = vector.broadcast %cst_67 : f32 to vector<16x64xf32>
    %182 = arith.mulf %181, %178 : vector<16x64xf32>
    %183 = arith.mulf %182, %178 : vector<16x64xf32>
    %184 = arith.mulf %183, %178 : vector<16x64xf32>
    %185 = arith.addf %178, %184 : vector<16x64xf32>
    %cst_68 = arith.constant 0.797884583 : f32
    %186 = vector.broadcast %cst_68 : f32 to vector<16x64xf32>
    %187 = arith.mulf %186, %185 : vector<16x64xf32>
    %188 = math.tanh %187 : vector<16x64xf32>
    %cst_69 = arith.constant 1.000000e+00 : f32
    %189 = vector.broadcast %cst_69 : f32 to vector<16x64xf32>
    %190 = arith.addf %189, %188 : vector<16x64xf32>
    %191 = arith.mulf %180, %190 : vector<16x64xf32>
    %192 = arith.truncf %191 : vector<16x64xf32> to vector<16x64xbf16>
    %193 = arith.index_cast %c0_i32 : i32 to index
    %c0_70 = arith.constant 0 : index
    %c0_71 = arith.constant 0 : index
    %194 = vector.load %arg12[%193, %c0_70, %c0_71] : memref<2x64x32xbf16, #tpu.memory_space<vmem>>, vector<1x64x32xbf16>
    %195 = vector.shape_cast %194 : vector<1x64x32xbf16> to vector<64x32xbf16>
    %cst_72 = arith.constant dense<0.000000e+00> : vector<16x32xf32>
    %196 = tpu.matmul %192, %195, %cst_72 {dimension_numbers = #tpu.dot_dimension_numbers<[1], [0], [0], [1], [0, 0, 1, 1], [], []>} : vector<16x64xbf16>, vector<64x32xbf16>, vector<16x32xf32> -> vector<16x32xf32>
    %197 = arith.index_cast %c0_i32 : i32 to index
    %c0_73 = arith.constant 0 : index
    %c0_74 = arith.constant 0 : index
    %198 = vector.load %arg13[%197, %c0_73, %c0_74] : memref<2x1x32xf32, #tpu.memory_space<vmem>>, vector<1x1x32xf32>
    %199 = vector.shape_cast %198 : vector<1x1x32xf32> to vector<1x32xf32>
    %200 = vector.broadcast %199 : vector<1x32xf32> to vector<16x32xf32>
    %201 = arith.addf %196, %200 : vector<16x32xf32>
    %202 = arith.addf %201, %168 : vector<16x32xf32>
    %203 = arith.index_cast %c0_i32 : i32 to index
    %c0_75 = arith.constant 0 : index
    %c0_76 = arith.constant 0 : index
    %204 = vector.load %arg14[%203, %c0_75, %c0_76] : memref<2x1x32xf32, #tpu.memory_space<vmem>>, vector<1x1x32xf32>
    %205 = vector.shape_cast %204 : vector<1x1x32xf32> to vector<1x32xf32>
    %206 = arith.index_cast %c0_i32 : i32 to index
    %c0_77 = arith.constant 0 : index
    %c0_78 = arith.constant 0 : index
    %207 = vector.load %arg15[%206, %c0_77, %c0_78] : memref<2x1x32xf32, #tpu.memory_space<vmem>>, vector<1x1x32xf32>
    %208 = vector.shape_cast %207 : vector<1x1x32xf32> to vector<1x32xf32>
    %cst_79 = arith.constant dense<0.000000e+00> : vector<16xf32>
    %209 = vector.multi_reduction <add>, %202, %cst_79 [1] : vector<16x32xf32> to vector<16xf32>
    %210 = vector.shape_cast %209 : vector<16xf32> to vector<16x1xf32>
    %cst_80 = arith.constant 3.200000e+01 : f32
    %211 = vector.broadcast %cst_80 : f32 to vector<16x1xf32>
    %212 = arith.divf %210, %211 : vector<16x1xf32>
    %213 = vector.broadcast %212 : vector<16x1xf32> to vector<16x32xf32>
    %214 = arith.subf %202, %213 : vector<16x32xf32>
    %215 = arith.mulf %214, %214 : vector<16x32xf32>
    %cst_81 = arith.constant dense<0.000000e+00> : vector<16xf32>
    %216 = vector.multi_reduction <add>, %215, %cst_81 [1] : vector<16x32xf32> to vector<16xf32>
    %217 = vector.shape_cast %216 : vector<16xf32> to vector<16x1xf32>
    %cst_82 = arith.constant 3.200000e+01 : f32
    %218 = vector.broadcast %cst_82 : f32 to vector<16x1xf32>
    %219 = arith.divf %217, %218 : vector<16x1xf32>
    %220 = vector.broadcast %212 : vector<16x1xf32> to vector<16x32xf32>
    %221 = arith.subf %202, %220 : vector<16x32xf32>
    %cst_83 = arith.constant 9.99999996E-13 : f32
    %222 = vector.broadcast %cst_83 : f32 to vector<16x1xf32>
    %223 = arith.addf %219, %222 : vector<16x1xf32>
    %224 = math.rsqrt %223 : vector<16x1xf32>
    %225 = vector.broadcast %224 : vector<16x1xf32> to vector<16x32xf32>
    %226 = arith.mulf %221, %225 : vector<16x32xf32>
    %227 = vector.broadcast %205 : vector<1x32xf32> to vector<16x32xf32>
    %228 = arith.mulf %226, %227 : vector<16x32xf32>
    %229 = vector.broadcast %208 : vector<1x32xf32> to vector<16x32xf32>
    %230 = arith.addf %228, %229 : vector<16x32xf32>
    %c1_i32 = arith.constant 1 : i32
    %231 = arith.truncf %230 : vector<16x32xf32> to vector<16x32xbf16>
    %232 = arith.index_cast %c1_i32 : i32 to index
    %c0_84 = arith.constant 0 : index
    %c0_85 = arith.constant 0 : index
    %233 = vector.load %arg4[%232, %c0_84, %c0_85] : memref<2x32x96xbf16, #tpu.memory_space<vmem>>, vector<1x32x96xbf16>
    %234 = vector.shape_cast %233 : vector<1x32x96xbf16> to vector<32x96xbf16>
    %cst_86 = arith.constant dense<0.000000e+00> : vector<16x96xf32>
    %235 = tpu.matmul %231, %234, %cst_86 {dimension_numbers = #tpu.dot_dimension_numbers<[1], [0], [0], [1], [0, 0, 1, 1], [], []>} : vector<16x32xbf16>, vector<32x96xbf16>, vector<16x96xf32> -> vector<16x96xf32>
    %236 = arith.index_cast %c1_i32 : i32 to index
    %c0_87 = arith.constant 0 : index
    %c0_88 = arith.constant 0 : index
    %237 = vector.load %arg5[%236, %c0_87, %c0_88] : memref<2x1x96xf32, #tpu.memory_space<vmem>>, vector<1x1x96xf32>
    %238 = vector.shape_cast %237 : vector<1x1x96xf32> to vector<1x96xf32>
    %239 = vector.broadcast %238 : vector<1x96xf32> to vector<16x96xf32>
    %240 = arith.addf %235, %239 : vector<16x96xf32>
    %c0_89 = arith.constant 0 : index
    %c0_90 = arith.constant 0 : index
    %c0_91 = arith.constant 0 : index
    %241 = vector.load %arg1[%c0_89, %c0_90, %c0_91] : memref<2x1x8xf32, #tpu.memory_space<vmem>>, vector<1x1x8xf32>
    %242 = vector.shape_cast %241 : vector<1x1x8xf32> to vector<1x8xf32>
    %243 = vector.extract_strided_slice %240 {offsets = [0, 0], sizes = [8, 96], strides = [1, 1]} : vector<16x96xf32> to vector<8x96xf32>
    %244 = vector.extract_strided_slice %243 {offsets = [0, 0], sizes = [8, 16], strides = [1, 1]} : vector<8x96xf32> to vector<8x16xf32>
    %245 = vector.extract_strided_slice %243 {offsets = [0, 32], sizes = [8, 16], strides = [1, 1]} : vector<8x96xf32> to vector<8x16xf32>
    %246 = vector.extract_strided_slice %243 {offsets = [0, 64], sizes = [8, 16], strides = [1, 1]} : vector<8x96xf32> to vector<8x16xf32>
    %cst_92 = arith.constant dense<0.000000e+00> : vector<8x8xf32>
    %247 = tpu.matmul %244, %245, %cst_92 {dimension_numbers = #tpu.dot_dimension_numbers<[1], [1], [0], [0], [0, 0, 1, 0], [], []>} : vector<8x16xf32>, vector<8x16xf32>, vector<8x8xf32> -> vector<8x8xf32>
    %cst_93 = arith.constant 2.500000e-01 : f32
    %248 = vector.broadcast %cst_93 : f32 to vector<8x8xf32>
    %249 = arith.mulf %247, %248 : vector<8x8xf32>
    %250 = vector.broadcast %242 : vector<1x8xf32> to vector<8x8xf32>
    %251 = arith.addf %249, %250 : vector<8x8xf32>
    %cst_94 = arith.constant dense<0xFF800000> : vector<8xf32>
    %252 = vector.multi_reduction <maximumf>, %251, %cst_94 [1] : vector<8x8xf32> to vector<8xf32>
    %253 = vector.shape_cast %252 : vector<8xf32> to vector<8x1xf32>
    %254 = vector.broadcast %253 : vector<8x1xf32> to vector<8x8xf32>
    %255 = arith.subf %251, %254 : vector<8x8xf32>
    %256 = math.exp %255 : vector<8x8xf32>
    %cst_95 = arith.constant dense<0.000000e+00> : vector<8xf32>
    %257 = vector.multi_reduction <add>, %256, %cst_95 [1] : vector<8x8xf32> to vector<8xf32>
    %258 = vector.shape_cast %257 : vector<8xf32> to vector<8x1xf32>
    %259 = tpu.reciprocal %258 : vector<8x1xf32> -> vector<8x1xf32>
    %260 = vector.broadcast %259 : vector<8x1xf32> to vector<8x8xf32>
    %261 = arith.mulf %256, %260 : vector<8x8xf32>
    %262 = arith.truncf %261 : vector<8x8xf32> to vector<8x8xbf16>
    %263 = arith.truncf %246 : vector<8x16xf32> to vector<8x16xbf16>
    %cst_96 = arith.constant dense<0.000000e+00> : vector<8x16xf32>
    %264 = tpu.matmul %262, %263, %cst_96 {dimension_numbers = #tpu.dot_dimension_numbers<[1], [0], [0], [1], [0, 0, 1, 1], [], []>} : vector<8x8xbf16>, vector<8x16xbf16>, vector<8x16xf32> -> vector<8x16xf32>
    %c0_97 = arith.constant 0 : index
    %c0_98 = arith.constant 0 : index
    %265 = vector.load %arg17[%c0_97, %c0_98] : memref<16x32xf32, #tpu.memory_space<vmem>>, vector<8x16xf32>
    tpu.vector_store %arg17[%c0_97, %c0_98], %264 {strides = array<i32>} : memref<16x32xf32, #tpu.memory_space<vmem>>, vector<8x16xf32>,
    %266 = vector.extract_strided_slice %243 {offsets = [0, 16], sizes = [8, 16], strides = [1, 1]} : vector<8x96xf32> to vector<8x16xf32>
    %267 = vector.extract_strided_slice %243 {offsets = [0, 48], sizes = [8, 16], strides = [1, 1]} : vector<8x96xf32> to vector<8x16xf32>
    %268 = vector.extract_strided_slice %243 {offsets = [0, 80], sizes = [8, 16], strides = [1, 1]} : vector<8x96xf32> to vector<8x16xf32>
    %cst_99 = arith.constant dense<0.000000e+00> : vector<8x8xf32>
    %269 = tpu.matmul %266, %267, %cst_99 {dimension_numbers = #tpu.dot_dimension_numbers<[1], [1], [0], [0], [0, 0, 1, 0], [], []>} : vector<8x16xf32>, vector<8x16xf32>, vector<8x8xf32> -> vector<8x8xf32>
    %cst_100 = arith.constant 2.500000e-01 : f32
    %270 = vector.broadcast %cst_100 : f32 to vector<8x8xf32>
    %271 = arith.mulf %269, %270 : vector<8x8xf32>
    %272 = vector.broadcast %242 : vector<1x8xf32> to vector<8x8xf32>
    %273 = arith.addf %271, %272 : vector<8x8xf32>
    %cst_101 = arith.constant dense<0xFF800000> : vector<8xf32>
    %274 = vector.multi_reduction <maximumf>, %273, %cst_101 [1] : vector<8x8xf32> to vector<8xf32>
    %275 = vector.shape_cast %274 : vector<8xf32> to vector<8x1xf32>
    %276 = vector.broadcast %275 : vector<8x1xf32> to vector<8x8xf32>
    %277 = arith.subf %273, %276 : vector<8x8xf32>
    %278 = math.exp %277 : vector<8x8xf32>
    %cst_102 = arith.constant dense<0.000000e+00> : vector<8xf32>
    %279 = vector.multi_reduction <add>, %278, %cst_102 [1] : vector<8x8xf32> to vector<8xf32>
    %280 = vector.shape_cast %279 : vector<8xf32> to vector<8x1xf32>
    %281 = tpu.reciprocal %280 : vector<8x1xf32> -> vector<8x1xf32>
    %282 = vector.broadcast %281 : vector<8x1xf32> to vector<8x8xf32>
    %283 = arith.mulf %278, %282 : vector<8x8xf32>
    %284 = arith.truncf %283 : vector<8x8xf32> to vector<8x8xbf16>
    %285 = arith.truncf %268 : vector<8x16xf32> to vector<8x16xbf16>
    %cst_103 = arith.constant dense<0.000000e+00> : vector<8x16xf32>
    %286 = tpu.matmul %284, %285, %cst_103 {dimension_numbers = #tpu.dot_dimension_numbers<[1], [0], [0], [1], [0, 0, 1, 1], [], []>} : vector<8x8xbf16>, vector<8x16xbf16>, vector<8x16xf32> -> vector<8x16xf32>
    %c0_104 = arith.constant 0 : index
    %c16_105 = arith.constant 16 : index
    %287 = vector.load %arg17[%c0_104, %c16_105] : memref<16x32xf32, #tpu.memory_space<vmem>>, vector<8x16xf32>
    tpu.vector_store %arg17[%c0_104, %c16_105], %286 {strides = array<i32>} : memref<16x32xf32, #tpu.memory_space<vmem>>, vector<8x16xf32>,
    %c1_106 = arith.constant 1 : index
    %c0_107 = arith.constant 0 : index
    %c0_108 = arith.constant 0 : index
    %288 = vector.load %arg1[%c1_106, %c0_107, %c0_108] : memref<2x1x8xf32, #tpu.memory_space<vmem>>, vector<1x1x8xf32>
    %289 = vector.shape_cast %288 : vector<1x1x8xf32> to vector<1x8xf32>
    %290 = vector.extract_strided_slice %240 {offsets = [8, 0], sizes = [8, 96], strides = [1, 1]} : vector<16x96xf32> to vector<8x96xf32>
    %291 = vector.extract_strided_slice %290 {offsets = [0, 0], sizes = [8, 16], strides = [1, 1]} : vector<8x96xf32> to vector<8x16xf32>
    %292 = vector.extract_strided_slice %290 {offsets = [0, 32], sizes = [8, 16], strides = [1, 1]} : vector<8x96xf32> to vector<8x16xf32>
    %293 = vector.extract_strided_slice %290 {offsets = [0, 64], sizes = [8, 16], strides = [1, 1]} : vector<8x96xf32> to vector<8x16xf32>
    %cst_109 = arith.constant dense<0.000000e+00> : vector<8x8xf32>
    %294 = tpu.matmul %291, %292, %cst_109 {dimension_numbers = #tpu.dot_dimension_numbers<[1], [1], [0], [0], [0, 0, 1, 0], [], []>} : vector<8x16xf32>, vector<8x16xf32>, vector<8x8xf32> -> vector<8x8xf32>
    %cst_110 = arith.constant 2.500000e-01 : f32
    %295 = vector.broadcast %cst_110 : f32 to vector<8x8xf32>
    %296 = arith.mulf %294, %295 : vector<8x8xf32>
    %297 = vector.broadcast %289 : vector<1x8xf32> to vector<8x8xf32>
    %298 = arith.addf %296, %297 : vector<8x8xf32>
    %cst_111 = arith.constant dense<0xFF800000> : vector<8xf32>
    %299 = vector.multi_reduction <maximumf>, %298, %cst_111 [1] : vector<8x8xf32> to vector<8xf32>
    %300 = vector.shape_cast %299 : vector<8xf32> to vector<8x1xf32>
    %301 = vector.broadcast %300 : vector<8x1xf32> to vector<8x8xf32>
    %302 = arith.subf %298, %301 : vector<8x8xf32>
    %303 = math.exp %302 : vector<8x8xf32>
    %cst_112 = arith.constant dense<0.000000e+00> : vector<8xf32>
    %304 = vector.multi_reduction <add>, %303, %cst_112 [1] : vector<8x8xf32> to vector<8xf32>
    %305 = vector.shape_cast %304 : vector<8xf32> to vector<8x1xf32>
    %306 = tpu.reciprocal %305 : vector<8x1xf32> -> vector<8x1xf32>
    %307 = vector.broadcast %306 : vector<8x1xf32> to vector<8x8xf32>
    %308 = arith.mulf %303, %307 : vector<8x8xf32>
    %309 = arith.truncf %308 : vector<8x8xf32> to vector<8x8xbf16>
    %310 = arith.truncf %293 : vector<8x16xf32> to vector<8x16xbf16>
    %cst_113 = arith.constant dense<0.000000e+00> : vector<8x16xf32>
    %311 = tpu.matmul %309, %310, %cst_113 {dimension_numbers = #tpu.dot_dimension_numbers<[1], [0], [0], [1], [0, 0, 1, 1], [], []>} : vector<8x8xbf16>, vector<8x16xbf16>, vector<8x16xf32> -> vector<8x16xf32>
    %c8_114 = arith.constant 8 : index
    %c0_115 = arith.constant 0 : index
    %312 = vector.load %arg17[%c8_114, %c0_115] : memref<16x32xf32, #tpu.memory_space<vmem>>, vector<8x16xf32>
    tpu.vector_store %arg17[%c8_114, %c0_115], %311 {strides = array<i32>} : memref<16x32xf32, #tpu.memory_space<vmem>>, vector<8x16xf32>,
    %313 = vector.extract_strided_slice %290 {offsets = [0, 16], sizes = [8, 16], strides = [1, 1]} : vector<8x96xf32> to vector<8x16xf32>
    %314 = vector.extract_strided_slice %290 {offsets = [0, 48], sizes = [8, 16], strides = [1, 1]} : vector<8x96xf32> to vector<8x16xf32>
    %315 = vector.extract_strided_slice %290 {offsets = [0, 80], sizes = [8, 16], strides = [1, 1]} : vector<8x96xf32> to vector<8x16xf32>
    %cst_116 = arith.constant dense<0.000000e+00> : vector<8x8xf32>
    %316 = tpu.matmul %313, %314, %cst_116 {dimension_numbers = #tpu.dot_dimension_numbers<[1], [1], [0], [0], [0, 0, 1, 0], [], []>} : vector<8x16xf32>, vector<8x16xf32>, vector<8x8xf32> -> vector<8x8xf32>
    %cst_117 = arith.constant 2.500000e-01 : f32
    %317 = vector.broadcast %cst_117 : f32 to vector<8x8xf32>
    %318 = arith.mulf %316, %317 : vector<8x8xf32>
    %319 = vector.broadcast %289 : vector<1x8xf32> to vector<8x8xf32>
    %320 = arith.addf %318, %319 : vector<8x8xf32>
    %cst_118 = arith.constant dense<0xFF800000> : vector<8xf32>
    %321 = vector.multi_reduction <maximumf>, %320, %cst_118 [1] : vector<8x8xf32> to vector<8xf32>
    %322 = vector.shape_cast %321 : vector<8xf32> to vector<8x1xf32>
    %323 = vector.broadcast %322 : vector<8x1xf32> to vector<8x8xf32>
    %324 = arith.subf %320, %323 : vector<8x8xf32>
    %325 = math.exp %324 : vector<8x8xf32>
    %cst_119 = arith.constant dense<0.000000e+00> : vector<8xf32>
    %326 = vector.multi_reduction <add>, %325, %cst_119 [1] : vector<8x8xf32> to vector<8xf32>
    %327 = vector.shape_cast %326 : vector<8xf32> to vector<8x1xf32>
    %328 = tpu.reciprocal %327 : vector<8x1xf32> -> vector<8x1xf32>
    %329 = vector.broadcast %328 : vector<8x1xf32> to vector<8x8xf32>
    %330 = arith.mulf %325, %329 : vector<8x8xf32>
    %331 = arith.truncf %330 : vector<8x8xf32> to vector<8x8xbf16>
    %332 = arith.truncf %315 : vector<8x16xf32> to vector<8x16xbf16>
    %cst_120 = arith.constant dense<0.000000e+00> : vector<8x16xf32>
    %333 = tpu.matmul %331, %332, %cst_120 {dimension_numbers = #tpu.dot_dimension_numbers<[1], [0], [0], [1], [0, 0, 1, 1], [], []>} : vector<8x8xbf16>, vector<8x16xbf16>, vector<8x16xf32> -> vector<8x16xf32>
    %c8_121 = arith.constant 8 : index
    %c16_122 = arith.constant 16 : index
    %334 = vector.load %arg17[%c8_121, %c16_122] : memref<16x32xf32, #tpu.memory_space<vmem>>, vector<8x16xf32>
    tpu.vector_store %arg17[%c8_121, %c16_122], %333 {strides = array<i32>} : memref<16x32xf32, #tpu.memory_space<vmem>>, vector<8x16xf32>,
    %c0_123 = arith.constant 0 : index
    %c0_124 = arith.constant 0 : index
    %335 = vector.load %arg17[%c0_123, %c0_124] : memref<16x32xf32, #tpu.memory_space<vmem>>, vector<16x32xf32>
    %336 = arith.truncf %335 : vector<16x32xf32> to vector<16x32xbf16>
    %337 = arith.index_cast %c1_i32 : i32 to index
    %c0_125 = arith.constant 0 : index
    %c0_126 = arith.constant 0 : index
    %338 = vector.load %arg6[%337, %c0_125, %c0_126] : memref<2x32x32xbf16, #tpu.memory_space<vmem>>, vector<1x32x32xbf16>
    %339 = vector.shape_cast %338 : vector<1x32x32xbf16> to vector<32x32xbf16>
    %cst_127 = arith.constant dense<0.000000e+00> : vector<16x32xf32>
    %340 = tpu.matmul %336, %339, %cst_127 {dimension_numbers = #tpu.dot_dimension_numbers<[1], [0], [0], [1], [0, 0, 1, 1], [], []>} : vector<16x32xbf16>, vector<32x32xbf16>, vector<16x32xf32> -> vector<16x32xf32>
    %341 = arith.index_cast %c1_i32 : i32 to index
    %c0_128 = arith.constant 0 : index
    %c0_129 = arith.constant 0 : index
    %342 = vector.load %arg7[%341, %c0_128, %c0_129] : memref<2x1x32xf32, #tpu.memory_space<vmem>>, vector<1x1x32xf32>
    %343 = vector.shape_cast %342 : vector<1x1x32xf32> to vector<1x32xf32>
    %344 = vector.broadcast %343 : vector<1x32xf32> to vector<16x32xf32>
    %345 = arith.addf %340, %344 : vector<16x32xf32>
    %346 = arith.addf %345, %230 : vector<16x32xf32>
    %347 = arith.index_cast %c1_i32 : i32 to index
    %c0_130 = arith.constant 0 : index
    %c0_131 = arith.constant 0 : index
    %348 = vector.load %arg8[%347, %c0_130, %c0_131] : memref<2x1x32xf32, #tpu.memory_space<vmem>>, vector<1x1x32xf32>
    %349 = vector.shape_cast %348 : vector<1x1x32xf32> to vector<1x32xf32>
    %350 = arith.index_cast %c1_i32 : i32 to index
    %c0_132 = arith.constant 0 : index
    %c0_133 = arith.constant 0 : index
    %351 = vector.load %arg9[%350, %c0_132, %c0_133] : memref<2x1x32xf32, #tpu.memory_space<vmem>>, vector<1x1x32xf32>
    %352 = vector.shape_cast %351 : vector<1x1x32xf32> to vector<1x32xf32>
    %cst_134 = arith.constant dense<0.000000e+00> : vector<16xf32>
    %353 = vector.multi_reduction <add>, %346, %cst_134 [1] : vector<16x32xf32> to vector<16xf32>
    %354 = vector.shape_cast %353 : vector<16xf32> to vector<16x1xf32>
    %cst_135 = arith.constant 3.200000e+01 : f32
    %355 = vector.broadcast %cst_135 : f32 to vector<16x1xf32>
    %356 = arith.divf %354, %355 : vector<16x1xf32>
    %357 = vector.broadcast %356 : vector<16x1xf32> to vector<16x32xf32>
    %358 = arith.subf %346, %357 : vector<16x32xf32>
    %359 = arith.mulf %358, %358 : vector<16x32xf32>
    %cst_136 = arith.constant dense<0.000000e+00> : vector<16xf32>
    %360 = vector.multi_reduction <add>, %359, %cst_136 [1] : vector<16x32xf32> to vector<16xf32>
    %361 = vector.shape_cast %360 : vector<16xf32> to vector<16x1xf32>
    %cst_137 = arith.constant 3.200000e+01 : f32
    %362 = vector.broadcast %cst_137 : f32 to vector<16x1xf32>
    %363 = arith.divf %361, %362 : vector<16x1xf32>
    %364 = vector.broadcast %356 : vector<16x1xf32> to vector<16x32xf32>
    %365 = arith.subf %346, %364 : vector<16x32xf32>
    %cst_138 = arith.constant 9.99999996E-13 : f32
    %366 = vector.broadcast %cst_138 : f32 to vector<16x1xf32>
    %367 = arith.addf %363, %366 : vector<16x1xf32>
    %368 = math.rsqrt %367 : vector<16x1xf32>
    %369 = vector.broadcast %368 : vector<16x1xf32> to vector<16x32xf32>
    %370 = arith.mulf %365, %369 : vector<16x32xf32>
    %371 = vector.broadcast %349 : vector<1x32xf32> to vector<16x32xf32>
    %372 = arith.mulf %370, %371 : vector<16x32xf32>
    %373 = vector.broadcast %352 : vector<1x32xf32> to vector<16x32xf32>
    %374 = arith.addf %372, %373 : vector<16x32xf32>
    %375 = arith.truncf %374 : vector<16x32xf32> to vector<16x32xbf16>
    %376 = arith.index_cast %c1_i32 : i32 to index
    %c0_139 = arith.constant 0 : index
    %c0_140 = arith.constant 0 : index
    %377 = vector.load %arg10[%376, %c0_139, %c0_140] : memref<2x32x64xbf16, #tpu.memory_space<vmem>>, vector<1x32x64xbf16>
    %378 = vector.shape_cast %377 : vector<1x32x64xbf16> to vector<32x64xbf16>
    %cst_141 = arith.constant dense<0.000000e+00> : vector<16x64xf32>
    %379 = tpu.matmul %375, %378, %cst_141 {dimension_numbers = #tpu.dot_dimension_numbers<[1], [0], [0], [1], [0, 0, 1, 1], [], []>} : vector<16x32xbf16>, vector<32x64xbf16>, vector<16x64xf32> -> vector<16x64xf32>
    %380 = arith.index_cast %c1_i32 : i32 to index
    %c0_142 = arith.constant 0 : index
    %c0_143 = arith.constant 0 : index
    %381 = vector.load %arg11[%380, %c0_142, %c0_143] : memref<2x1x64xf32, #tpu.memory_space<vmem>>, vector<1x1x64xf32>
    %382 = vector.shape_cast %381 : vector<1x1x64xf32> to vector<1x64xf32>
    %383 = vector.broadcast %382 : vector<1x64xf32> to vector<16x64xf32>
    %384 = arith.addf %379, %383 : vector<16x64xf32>
    %cst_144 = arith.constant 5.000000e-01 : f32
    %385 = vector.broadcast %cst_144 : f32 to vector<16x64xf32>
    %386 = arith.mulf %385, %384 : vector<16x64xf32>
    %cst_145 = arith.constant 4.471500e-02 : f32
    %387 = vector.broadcast %cst_145 : f32 to vector<16x64xf32>
    %388 = arith.mulf %387, %384 : vector<16x64xf32>
    %389 = arith.mulf %388, %384 : vector<16x64xf32>
    %390 = arith.mulf %389, %384 : vector<16x64xf32>
    %391 = arith.addf %384, %390 : vector<16x64xf32>
    %cst_146 = arith.constant 0.797884583 : f32
    %392 = vector.broadcast %cst_146 : f32 to vector<16x64xf32>
    %393 = arith.mulf %392, %391 : vector<16x64xf32>
    %394 = math.tanh %393 : vector<16x64xf32>
    %cst_147 = arith.constant 1.000000e+00 : f32
    %395 = vector.broadcast %cst_147 : f32 to vector<16x64xf32>
    %396 = arith.addf %395, %394 : vector<16x64xf32>
    %397 = arith.mulf %386, %396 : vector<16x64xf32>
    %398 = arith.truncf %397 : vector<16x64xf32> to vector<16x64xbf16>
    %399 = arith.index_cast %c1_i32 : i32 to index
    %c0_148 = arith.constant 0 : index
    %c0_149 = arith.constant 0 : index
    %400 = vector.load %arg12[%399, %c0_148, %c0_149] : memref<2x64x32xbf16, #tpu.memory_space<vmem>>, vector<1x64x32xbf16>
    %401 = vector.shape_cast %400 : vector<1x64x32xbf16> to vector<64x32xbf16>
    %cst_150 = arith.constant dense<0.000000e+00> : vector<16x32xf32>
    %402 = tpu.matmul %398, %401, %cst_150 {dimension_numbers = #tpu.dot_dimension_numbers<[1], [0], [0], [1], [0, 0, 1, 1], [], []>} : vector<16x64xbf16>, vector<64x32xbf16>, vector<16x32xf32> -> vector<16x32xf32>
    %403 = arith.index_cast %c1_i32 : i32 to index
    %c0_151 = arith.constant 0 : index
    %c0_152 = arith.constant 0 : index
    %404 = vector.load %arg13[%403, %c0_151, %c0_152] : memref<2x1x32xf32, #tpu.memory_space<vmem>>, vector<1x1x32xf32>
    %405 = vector.shape_cast %404 : vector<1x1x32xf32> to vector<1x32xf32>
    %406 = vector.broadcast %405 : vector<1x32xf32> to vector<16x32xf32>
    %407 = arith.addf %402, %406 : vector<16x32xf32>
    %408 = arith.addf %407, %374 : vector<16x32xf32>
    %409 = arith.index_cast %c1_i32 : i32 to index
    %c0_153 = arith.constant 0 : index
    %c0_154 = arith.constant 0 : index
    %410 = vector.load %arg14[%409, %c0_153, %c0_154] : memref<2x1x32xf32, #tpu.memory_space<vmem>>, vector<1x1x32xf32>
    %411 = vector.shape_cast %410 : vector<1x1x32xf32> to vector<1x32xf32>
    %412 = arith.index_cast %c1_i32 : i32 to index
    %c0_155 = arith.constant 0 : index
    %c0_156 = arith.constant 0 : index
    %413 = vector.load %arg15[%412, %c0_155, %c0_156] : memref<2x1x32xf32, #tpu.memory_space<vmem>>, vector<1x1x32xf32>
    %414 = vector.shape_cast %413 : vector<1x1x32xf32> to vector<1x32xf32>
    %cst_157 = arith.constant dense<0.000000e+00> : vector<16xf32>
    %415 = vector.multi_reduction <add>, %408, %cst_157 [1] : vector<16x32xf32> to vector<16xf32>
    %416 = vector.shape_cast %415 : vector<16xf32> to vector<16x1xf32>
    %cst_158 = arith.constant 3.200000e+01 : f32
    %417 = vector.broadcast %cst_158 : f32 to vector<16x1xf32>
    %418 = arith.divf %416, %417 : vector<16x1xf32>
    %419 = vector.broadcast %418 : vector<16x1xf32> to vector<16x32xf32>
    %420 = arith.subf %408, %419 : vector<16x32xf32>
    %421 = arith.mulf %420, %420 : vector<16x32xf32>
    %cst_159 = arith.constant dense<0.000000e+00> : vector<16xf32>
    %422 = vector.multi_reduction <add>, %421, %cst_159 [1] : vector<16x32xf32> to vector<16xf32>
    %423 = vector.shape_cast %422 : vector<16xf32> to vector<16x1xf32>
    %cst_160 = arith.constant 3.200000e+01 : f32
    %424 = vector.broadcast %cst_160 : f32 to vector<16x1xf32>
    %425 = arith.divf %423, %424 : vector<16x1xf32>
    %426 = vector.broadcast %418 : vector<16x1xf32> to vector<16x32xf32>
    %427 = arith.subf %408, %426 : vector<16x32xf32>
    %cst_161 = arith.constant 9.99999996E-13 : f32
    %428 = vector.broadcast %cst_161 : f32 to vector<16x1xf32>
    %429 = arith.addf %425, %428 : vector<16x1xf32>
    %430 = math.rsqrt %429 : vector<16x1xf32>
    %431 = vector.broadcast %430 : vector<16x1xf32> to vector<16x32xf32>
    %432 = arith.mulf %427, %431 : vector<16x32xf32>
    %433 = vector.broadcast %411 : vector<1x32xf32> to vector<16x32xf32>
    %434 = arith.mulf %432, %433 : vector<16x32xf32>
    %435 = vector.broadcast %414 : vector<1x32xf32> to vector<16x32xf32>
    %436 = arith.addf %434, %435 : vector<16x32xf32>
    %c2_i32 = arith.constant 2 : i32
    %c0_162 = arith.constant 0 : index
    %c0_163 = arith.constant 0 : index
    %437 = vector.load %arg16[%c0_162, %c0_163] : memref<16x32xf32, #tpu.memory_space<vmem>>, vector<16x32xf32>
    tpu.vector_store %arg16[%c0_162, %c0_163], %436 {strides = array<i32>} : memref<16x32xf32, #tpu.memory_space<vmem>>, vector<16x32xf32>,
    return
  }
}

</mosaic_0001>

<llo_original>
// kernel: mul.0
$region0: #{mul.0}
  #allocation0 [shape = 's32[1]{0}', space=sflag, size = 0x4, scoped, tag = 'scoped memory for mul.0']
  %s0 = inlined_call_operand.vmem [shape: f32[2,1,8], index: 0, kind: input, shape index: {}]
  %s1 = inlined_call_operand.vmem [shape: f32[2,1,8], index: 1, kind: input, shape index: {}]
  %s2 = inlined_call_operand.vmem [shape: f32[2,1,8], index: 2, kind: output, shape index: {}]
  %v3 = vld [vmem:[%s0] sm:$0x1]
  %v4 = vld [vmem:[%s1] sm:$0x1]
  %5 = xla_tuple %v3, %v4
  %6 = xla_tuple %5
  %v7 = vmul.f32 %v3, %v4
  %8 = xla_tuple %v7
  %9 = vst [vmem:[%s2] sm:$0x1] %v7
  %s10 = scalar_lea.vmem %s0, 1
  %v11 = vld [vmem:[%s10] sm:$0x1]
  %s12 = scalar_lea.vmem %s1, 1
  %v13 = vld [vmem:[%s12] sm:$0x1]
  %14 = xla_tuple %v11, %v13
  %15 = xla_tuple %14
  %v16 = vmul.f32 %v11, %v13
  %17 = xla_tuple %v16
  %s18 = scalar_lea.vmem %s2, 1
  %19 = vst [vmem:[%s18] sm:$0x1] %v16

// kernel: bbqq_forward.1
$region0: #{bbqq_forward.1}
  #allocation0 [shape = 'u32[]', space=smem, size = 0x4, offset = 0x4, fixed_abs, tag = 'smem constant byte address 0x4 - core index']
  #allocation1 [shape = 'u32[72,128]{1,0:T(1,128)}', space=vmem, size = 0x9000, scoped, tag = 'internal scratch']
  #allocation2 [shape = 'f32[16,32]{1,0:T(8,128)}', space=vmem, size = 0x2000, scoped, tag = 'scratch operand']
  %s0 = inlined_call_operand.vmem [shape: f32[16,32], index: 0, kind: input, shape index: {}]
  %s1 = inlined_call_operand.vmem [shape: f32[2,1,8], index: 1, kind: input, shape index: {}]
  %s2 = inlined_call_operand.vmem [shape: f32[1,32], index: 2, kind: input, shape index: {}]
  %s3 = inlined_call_operand.vmem [shape: f32[1,32], index: 3, kind: input, shape index: {}]
  %s4 = inlined_call_operand.vmem [shape: bf16[2,32,96], index: 4, kind: input, shape index: {}]
  %s5 = inlined_call_operand.vmem [shape: f32[2,1,96], index: 5, kind: input, shape index: {}]
  %s6 = inlined_call_operand.vmem [shape: bf16[2,32,32], index: 6, kind: input, shape index: {}]
  %s7 = inlined_call_operand.vmem [shape: f32[2,1,32], index: 7, kind: input, shape index: {}]
  %s8 = inlined_call_operand.vmem [shape: f32[2,1,32], index: 8, kind: input, shape index: {}]
  %s9 = inlined_call_operand.vmem [shape: f32[2,1,32], index: 9, kind: input, shape index: {}]
  %s10 = inlined_call_operand.vmem [shape: bf16[2,32,64], index: 10, kind: input, shape index: {}]
  %s11 = inlined_call_operand.vmem [shape: f32[2,1,64], index: 11, kind: input, shape index: {}]
  %s12 = inlined_call_operand.vmem [shape: bf16[2,64,32], index: 12, kind: input, shape index: {}]
  %s13 = inlined_call_operand.vmem [shape: f32[2,1,32], index: 13, kind: input, shape index: {}]
  %s14 = inlined_call_operand.vmem [shape: f32[2,1,32], index: 14, kind: input, shape index: {}]
  %s15 = inlined_call_operand.vmem [shape: f32[2,1,32], index: 15, kind: input, shape index: {}]
  %s16 = inlined_call_operand.hbm [shape: f32[16,32], index: 16, kind: output, shape index: {}]
  %s17 = sld [smem:[#allocation0]]
  $region74: #{bbqq_forward.1} parent=0
    _
  %s19 = ssub.s32 1, %s17
  %s20 = scalar_select 0, %s19, %s17
  $region1: #{bbqq_forward.1} parent=0
    #allocation3 [shape = 'u8[8192]{0}', space=vmem, size = 0x2000, scoped, tag = 'output window, operand 0, single buffered']
    #allocation4 [shape = 's32[1]{0}', space=sflag, size = 0x4, scoped, tag = 'scoped memory for bbqq_forward.1']
    %21 = vsyncpa [#allocation4], 0
    // Predicated region
    $region2: #{bbqq_forward.1} parent=1 // pred_check
      _
    $region3: #{bbqq_forward.1} parent=1 // pred_check_branch
      %23 = sbr.rel (0) target = $region5
    $region4: #{bbqq_forward.1} parent=1 // pred_region
      _
    $region5: #{bbqq_forward.1} parent=1 // pred_fallthru
      _
    // Predicated region
    $region6: #{bbqq_forward.1} parent=1 // pred_check
      _
    $region7: #{bbqq_forward.1} parent=1 // pred_check_branch
      %25 = sbr.rel (0) target = $region9
    $region8: #{bbqq_forward.1} parent=1 // pred_region
      _
    $region9: #{bbqq_forward.1} parent=1 // pred_fallthru
      _
    // Predicated region
    $region10: #{bbqq_forward.1} parent=1 // pred_check
      _
    $region11: #{bbqq_forward.1} parent=1 // pred_check_branch
      %27 = sbr.rel (0) target = $region13
    $region12: #{bbqq_forward.1} parent=1 // pred_region
      _
    $region13: #{bbqq_forward.1} parent=1 // pred_fallthru
      _
    // Predicated region
    $region14: #{bbqq_forward.1} parent=1 // pred_check
      _
    $region15: #{bbqq_forward.1} parent=1 // pred_check_branch
      %29 = sbr.rel (0) target = $region17
    $region16: #{bbqq_forward.1} parent=1 // pred_region
      _
    $region17: #{bbqq_forward.1} parent=1 // pred_fallthru
      _
    // Predicated region
    $region18: #{bbqq_forward.1} parent=1 // pred_check
      _
    $region19: #{bbqq_forward.1} parent=1 // pred_check_branch
      %31 = sbr.rel (0) target = $region21
    $region20: #{bbqq_forward.1} parent=1 // pred_region
      _
    $region21: #{bbqq_forward.1} parent=1 // pred_fallthru
      _
    // Predicated region
    $region22: #{bbqq_forward.1} parent=1 // pred_check
      _
    $region23: #{bbqq_forward.1} parent=1 // pred_check_branch
      %33 = sbr.rel (0) target = $region25
    $region24: #{bbqq_forward.1} parent=1 // pred_region
      _
    $region25: #{bbqq_forward.1} parent=1 // pred_fallthru
      _
    // Predicated region
    $region26: #{bbqq_forward.1} parent=1 // pred_check
      _
    $region27: #{bbqq_forward.1} parent=1 // pred_check_branch
      %35 = sbr.rel (0) target = $region29
    $region28: #{bbqq_forward.1} parent=1 // pred_region
      _
    $region29: #{bbqq_forward.1} parent=1 // pred_fallthru
      _
    // Predicated region
    $region30: #{bbqq_forward.1} parent=1 // pred_check
      _
    $region31: #{bbqq_forward.1} parent=1 // pred_check_branch
      %37 = sbr.rel (0) target = $region33
    $region32: #{bbqq_forward.1} parent=1 // pred_region
      _
    $region33: #{bbqq_forward.1} parent=1 // pred_fallthru
      _
    // Predicated region
    $region34: #{bbqq_forward.1} parent=1 // pred_check
      _
    $region35: #{bbqq_forward.1} parent=1 // pred_check_branch
      %39 = sbr.rel (0) target = $region37
    $region36: #{bbqq_forward.1} parent=1 // pred_region
      _
    $region37: #{bbqq_forward.1} parent=1 // pred_fallthru
      _
    // Predicated region
    $region38: #{bbqq_forward.1} parent=1 // pred_check
      _
    $region39: #{bbqq_forward.1} parent=1 // pred_check_branch
      %41 = sbr.rel (0) target = $region41
    $region40: #{bbqq_forward.1} parent=1 // pred_region
      _
    $region41: #{bbqq_forward.1} parent=1 // pred_fallthru
      _
    // Predicated region
    $region42: #{bbqq_forward.1} parent=1 // pred_check
      _
    $region43: #{bbqq_forward.1} parent=1 // pred_check_branch
      %43 = sbr.rel (0) target = $region45
    $region44: #{bbqq_forward.1} parent=1 // pred_region
      _
    $region45: #{bbqq_forward.1} parent=1 // pred_fallthru
      _
    // Predicated region
    $region46: #{bbqq_forward.1} parent=1 // pred_check
      _
    $region47: #{bbqq_forward.1} parent=1 // pred_check_branch
      %45 = sbr.rel (0) target = $region49
    $region48: #{bbqq_forward.1} parent=1 // pred_region
      _
    $region49: #{bbqq_forward.1} parent=1 // pred_fallthru
      _
    // Predicated region
    $region50: #{bbqq_forward.1} parent=1 // pred_check
      _
    $region51: #{bbqq_forward.1} parent=1 // pred_check_branch
      %47 = sbr.rel (0) target = $region53
    $region52: #{bbqq_forward.1} parent=1 // pred_region
      _
    $region53: #{bbqq_forward.1} parent=1 // pred_fallthru
      _
    // Predicated region
    $region54: #{bbqq_forward.1} parent=1 // pred_check
      _
    $region55: #{bbqq_forward.1} parent=1 // pred_check_branch
      %49 = sbr.rel (0) target = $region57
    $region56: #{bbqq_forward.1} parent=1 // pred_region
      _
    $region57: #{bbqq_forward.1} parent=1 // pred_fallthru
      _
    // Predicated region
    $region58: #{bbqq_forward.1} parent=1 // pred_check
      _
    $region59: #{bbqq_forward.1} parent=1 // pred_check_branch
      %51 = sbr.rel (0) target = $region61
    $region60: #{bbqq_forward.1} parent=1 // pred_region
      _
    $region61: #{bbqq_forward.1} parent=1 // pred_fallthru
      _
    // Predicated region
    $region62: #{bbqq_forward.1} parent=1 // pred_check
      _
    $region63: #{bbqq_forward.1} parent=1 // pred_check_branch
      %53 = sbr.rel (0) target = $region65
    $region64: #{bbqq_forward.1} parent=1 // pred_region
      _
    $region65: #{bbqq_forward.1} parent=1 // pred_fallthru
      _
    %v55 = vld [vmem:[%s0] sm:$0xff]
    %v56 = vld [vmem:[%s0 + $0x8] sm:$0xff]
    %v57 = vld [vmem:[%s2] sm:$0x1]
    %v58 = vld [vmem:[%s3] sm:$0x1]
    %vm59 = vcmask 261120
    %v60 = vsel %vm59, %v55, 0.0
    %61 = vadd.xlane.f32.xlu0 %v60
    %v62 = vpop.xlane.xlu0 %61
    %v63 = vsel %vm59, %v56, 0.0
    %64 = vadd.xlane.f32.xlu0 %v63
    %v65 = vpop.xlane.xlu0 %64
    %v66 = vrcp.pop 32.0
    %v67 = vmul.f32 32.0, %v66
    %v68 = vsub.f32 1.0, %v67
    %v69 = vmul.f32 %v66, %v68
    %v70 = vadd.f32 %v66, %v69
    %vm71 = vweird.f32 %v66
    %v72 = vsel %vm71, %v66, %v70
    %v73 = vmul.f32 %v62, %v72
    %v74 = vmul.f32 %v65, %v72
    %v75 = vsub.f32 %v55, %v73
    %v76 = vsub.f32 %v56, %v74
    %v77 = vmul.f32 %v75, %v75
    %v78 = vmul.f32 %v76, %v76
    %v79 = vsel %vm59, %v77, 0.0
    %80 = vadd.xlane.f32.xlu0 %v79
    %v81 = vpop.xlane.xlu0 %80
    %v82 = vsel %vm59, %v78, 0.0
    %83 = vadd.xlane.f32.xlu0 %v82
    %v84 = vpop.xlane.xlu0 %83
    %v85 = vmul.f32 %v81, %v72
    %v86 = vmul.f32 %v84, %v72
    %v87 = vadd.f32 %v85, 1e-12
    %v88 = vadd.f32 %v86, 1e-12
    %v89 = vrsqrt.pop %v87
    %v90 = vmul.f32 %v89, %v87
    %v91 = vmul.f32 %v90, %v89
    %v92 = vmul.f32 0.5, %v91
    %v93 = vsub.f32 1.5, %v92
    %v94 = vmul.f32 %v89, %v93
    %vm95 = vweird.f32 %v87
    %vm96 = vweird.f32 %v89
    %vm97 = vmor %vm95, %vm96
    %v98 = vsel %vm97, %v89, %v94
    %v99 = vrsqrt.pop %v88
    %v100 = vmul.f32 %v99, %v88
    %v101 = vmul.f32 %v100, %v99
    %v102 = vmul.f32 0.5, %v101
    %v103 = vsub.f32 1.5, %v102
    %v104 = vmul.f32 %v99, %v103
    %vm105 = vweird.f32 %v88
    %vm106 = vweird.f32 %v99
    %vm107 = vmor %vm105, %vm106
    %v108 = vsel %vm107, %v99, %v104
    %v109 = vmul.f32 %v75, %v98
    %v110 = vmul.f32 %v76, %v108
    %v112 = vperm.slane %v57, 0
    %v114 = vmul.f32 %v109, %v112
    %v115 = vmul.f32 %v110, %v112
    %v117 = vperm.slane %v58, 0
    %v119 = vadd.f32 %v114, %v117
    %v120 = vadd.f32 %v115, %v117
    %v121 = vpack.c.bf16 %v120, %v119
    %v122 = vld [vmem:[%s4] sm:$0xf]
    %v123 = vld [vmem:[%s4 + $0x4] sm:$0xf]
    %v124 = vld [vmem:[%s4 + $0x8] sm:$0xf]
    %v125 = vld [vmem:[%s4 + $0xc] sm:$0xf]
    %v126 = vld [vmem:[%s5] sm:$0x1]
    %v128 = vperm.slane %v126, 0
    %v134 = vunpack.c.l.b16 %v122
    %v135 = vunpack.c.l.b16 %v123
    %v136 = vunpack.c.l.b16 %v124
    %v137 = vunpack.c.l.b16 %v125
    %v138 = vpack.c.b16 %v135, %v134
    %v139 = vpack.c.b16 %v137, %v136
    %v143 = vsel %vm59, %v121, 0
    %145 = vmatpush.bf16.msra.mxu0 0
    %146 = vmatpush.bf16.msra.mxu0 0
    %147 = vmatpush.bf16.msra.mxu0 0
    %148 = vmatpush.bf16.msra.mxu0 0
    %149 = vmatpush.bf16.msra.mxu0 0
    %150 = vmatpush.bf16.msra.mxu0 0
    %151 = vmatpush.bf16.msra.mxu0 %v139
    %152 = vmatpush.bf16.msra.mxu0 %v138
    %153 = vmatmul.bf16.gmra.mxu0 %v143
    %v154 = vpop.f32.mrf.mxu0
    %v155 = vadd.f32 %v128, %v154
    %v156 = vpop.f32.mrf.mxu0
    %v157 = vadd.f32 %v128, %v156
    %158 = vdwg.mxu0
    %v159 = vld [vmem:[%s1] sm:$0x1]
    %161 = vrot.lane.b32.xlu0 %v155, 96
    %v162 = vpop.permute.xlu0 %161
    %vm163 = vcmask 130048
    %v164 = vsel %vm163, %v155, 0
    %v166 = vsel %vm163, %v162, 0
    %168 = vmatpush.xpose.msra.mxu0 0.0
    %169 = vmatpush.xpose.msra.mxu0 0.0
    %170 = vmatpush.xpose.msra.mxu0 0.0
    %171 = vmatpush.xpose.msra.mxu0 0.0
    %172 = vmatpush.xpose.msra.mxu0 0.0
    %173 = vmatpush.xpose.msra.mxu0 0.0
    %174 = vmatpush.xpose.msra.mxu0 0.0
    %175 = vmatpush.xpose.msra.mxu0 0.0
    %176 = vmatpush.xpose.msra.mxu0 0.0
    %177 = vmatpush.xpose.msra.mxu0 0.0
    %178 = vmatpush.xpose.msra.mxu0 0.0
    %179 = vmatpush.xpose.msra.mxu0 0.0
    %180 = vmatpush.xpose.msra.mxu0 0.0
    %181 = vmatpush.xpose.msra.mxu0 0.0
    %182 = vmatpush.xpose.msra.mxu0 0.0
    %183 = vmatpush.xpose.msra.mxu0 %v166
    %184 = vmatmul.f32.gmra.mxu0 %v164
    %v185 = vpop.f32.mrf.mxu0
    %v186 = vadd.f32 0.0, %v185
    %187 = vdwg.mxu0
    %v188 = vmul.f32 %v186, 0.25
    %v190 = vperm.slane %v159, 0
    %v192 = vadd.f32 %v188, %v190
    %vm193 = vcmask 64512
    %v194 = vsel %vm193, %v192, -inf
    %195 = vmax.xlane.f32.xlu0 %v194
    %v196 = vpop.xlane.xlu0 %195
    %v197 = vsub.f32 %v192, %v196
    %v198 = vmul.f32 %v197, 1.442695
    %v199 = vpow.pop %v198
    %v200 = vsel %vm193, %v199, 0.0
    %201 = vadd.xlane.f32.xlu0 %v200
    %v202 = vpop.xlane.xlu0 %201
    %v203 = vrcp.pop %v202
    %v204 = vmul.f32 %v202, %v203
    %v205 = vsub.f32 1.0, %v204
    %v206 = vmul.f32 %v203, %v205
    %v207 = vadd.f32 %v203, %v206
    %vm208 = vweird.f32 %v202
    %vm209 = vweird.f32 %v203
    %vm210 = vmor %vm208, %vm209
    %v211 = vsel %vm210, %v203, %v207
    %v212 = vand.u32 2147483647, %v202
    %vm213 = vcmp.eq.f32.partialorder %v212, 8.507059e+37
    %v214 = vand.u32 %v202, 2147483648
    %v215 = vor.u32 1.1754944e-38, %v214
    %v216 = vsel %vm213, %v215, %v211
    %v217 = vmul.f32 %v199, %v216
    %v218 = vpack.c.bf16 %v217, %v217
    %v219 = vpack.c.bf16 %v155, %v155
    %221 = vrot.lane.b32.xlu0 %v219, 64
    %v222 = vpop.permute.xlu0 %221
    %v224 = vsel %vm193, %v218, 0
    %vm226 = vcmask 1043456
    %v228 = vsel %vm226, %v222, 0
    %230 = vmatpush.bf16.msra.mxu0 0
    %231 = vmatpush.bf16.msra.mxu0 0
    %232 = vmatpush.bf16.msra.mxu0 0
    %233 = vmatpush.bf16.msra.mxu0 0
    %234 = vmatpush.bf16.msra.mxu0 0
    %235 = vmatpush.bf16.msra.mxu0 0
    %236 = vmatpush.bf16.msra.mxu0 0
    %237 = vmatpush.bf16.msra.mxu0 %v228
    %238 = vmatmul.bf16.gmra.mxu0 %v224
    %v239 = vpop.f32.mrf.mxu0
    %v240 = vadd.f32 0.0, %v239
    %v241 = vpop.f32.mrf.mxu0
    %242 = vdwg.mxu0
    %243 = vst.msk [vmem:[#allocation2] sm:$0xff] %vm163, %v240
    %244 = vrot.lane.b32.xlu0 %v155, 112
    %v245 = vpop.permute.xlu0 %244
    %246 = vrot.lane.b32.xlu0 %v155, 80
    %v247 = vpop.permute.xlu0 %246
    %v248 = vsel %vm163, %v245, 0
    %v250 = vsel %vm163, %v247, 0
    %252 = vmatpush.xpose.msra.mxu0 0.0
    %253 = vmatpush.xpose.msra.mxu0 0.0
    %254 = vmatpush.xpose.msra.mxu0 0.0
    %255 = vmatpush.xpose.msra.mxu0 0.0
    %256 = vmatpush.xpose.msra.mxu0 0.0
    %257 = vmatpush.xpose.msra.mxu0 0.0
    %258 = vmatpush.xpose.msra.mxu0 0.0
    %259 = vmatpush.xpose.msra.mxu0 0.0
    %260 = vmatpush.xpose.msra.mxu0 0.0
    %261 = vmatpush.xpose.msra.mxu0 0.0
    %262 = vmatpush.xpose.msra.mxu0 0.0
    %263 = vmatpush.xpose.msra.mxu0 0.0
    %264 = vmatpush.xpose.msra.mxu0 0.0
    %265 = vmatpush.xpose.msra.mxu0 0.0
    %266 = vmatpush.xpose.msra.mxu0 0.0
    %267 = vmatpush.xpose.msra.mxu0 %v250
    %268 = vmatmul.f32.gmra.mxu0 %v248
    %v269 = vpop.f32.mrf.mxu0
    %v270 = vadd.f32 0.0, %v269
    %271 = vdwg.mxu0
    %v272 = vmul.f32 %v270, 0.25
    %v273 = vadd.f32 %v272, %v190
    %v274 = vsel %vm193, %v273, -inf
    %275 = vmax.xlane.f32.xlu0 %v274
    %v276 = vpop.xlane.xlu0 %275
    %v277 = vsub.f32 %v273, %v276
    %v278 = vmul.f32 %v277, 1.442695
    %v279 = vpow.pop %v278
    %v280 = vsel %vm193, %v279, 0.0
    %281 = vadd.xlane.f32.xlu0 %v280
    %v282 = vpop.xlane.xlu0 %281
    %v283 = vrcp.pop %v282
    %v284 = vmul.f32 %v282, %v283
    %v285 = vsub.f32 1.0, %v284
    %v286 = vmul.f32 %v283, %v285
    %v287 = vadd.f32 %v283, %v286
    %vm288 = vweird.f32 %v282
    %vm289 = vweird.f32 %v283
    %vm290 = vmor %vm288, %vm289
    %v291 = vsel %vm290, %v283, %v287
    %v292 = vand.u32 2147483647, %v282
    %vm293 = vcmp.eq.f32.partialorder %v292, 8.507059e+37
    %v294 = vand.u32 %v282, 2147483648
    %v295 = vor.u32 1.1754944e-38, %v294
    %v296 = vsel %vm293, %v295, %v291
    %v297 = vmul.f32 %v279, %v296
    %v298 = vpack.c.bf16 %v297, %v297
    %299 = vrot.lane.b32.xlu0 %v219, 48
    %v300 = vpop.permute.xlu0 %299
    %v302 = vsel %vm193, %v298, 0
    %v305 = vsel %vm226, %v300, 0
    %307 = vmatpush.bf16.msra.mxu0 0
    %308 = vmatpush.bf16.msra.mxu0 0
    %309 = vmatpush.bf16.msra.mxu0 0
    %310 = vmatpush.bf16.msra.mxu0 0
    %311 = vmatpush.bf16.msra.mxu0 0
    %312 = vmatpush.bf16.msra.mxu0 0
    %313 = vmatpush.bf16.msra.mxu0 0
    %314 = vmatpush.bf16.msra.mxu0 %v305
    %315 = vmatmul.bf16.gmra.mxu0 %v302
    %v316 = vpop.f32.mrf.mxu0
    %v317 = vadd.f32 0.0, %v316
    %v318 = vpop.f32.mrf.mxu0
    %319 = vdwg.mxu0
    %321 = vrot.lane.b32.xlu0 %v317, 16
    %v322 = vpop.permute.xlu0 %321
    %vm324 = vcmask 261248
    %325 = vst.msk [vmem:[#allocation2] sm:$0xff] %vm324, %v322
    %s326 = scalar_lea.vmem %s1, 1
    %v327 = vld [vmem:[%s326] sm:$0x1]
    %329 = vrot.lane.b32.xlu0 %v157, 96
    %v330 = vpop.permute.xlu0 %329
    %v331 = vsel %vm163, %v157, 0
    %v333 = vsel %vm163, %v330, 0
    %335 = vmatpush.xpose.msra.mxu0 0.0
    %336 = vmatpush.xpose.msra.mxu0 0.0
    %337 = vmatpush.xpose.msra.mxu0 0.0
    %338 = vmatpush.xpose.msra.mxu0 0.0
    %339 = vmatpush.xpose.msra.mxu0 0.0
    %340 = vmatpush.xpose.msra.mxu0 0.0
    %341 = vmatpush.xpose.msra.mxu0 0.0
    %342 = vmatpush.xpose.msra.mxu0 0.0
    %343 = vmatpush.xpose.msra.mxu0 0.0
    %344 = vmatpush.xpose.msra.mxu0 0.0
    %345 = vmatpush.xpose.msra.mxu0 0.0
    %346 = vmatpush.xpose.msra.mxu0 0.0
    %347 = vmatpush.xpose.msra.mxu0 0.0
    %348 = vmatpush.xpose.msra.mxu0 0.0
    %349 = vmatpush.xpose.msra.mxu0 0.0
    %350 = vmatpush.xpose.msra.mxu0 %v333
    %351 = vmatmul.f32.gmra.mxu0 %v331
    %v352 = vpop.f32.mrf.mxu0
    %v353 = vadd.f32 0.0, %v352
    %354 = vdwg.mxu0
    %v355 = vmul.f32 %v353, 0.25
    %v357 = vperm.slane %v327, 0
    %v359 = vadd.f32 %v355, %v357
    %v360 = vsel %vm193, %v359, -inf
    %361 = vmax.xlane.f32.xlu0 %v360
    %v362 = vpop.xlane.xlu0 %361
    %v363 = vsub.f32 %v359, %v362
    %v364 = vmul.f32 %v363, 1.442695
    %v365 = vpow.pop %v364
    %v366 = vsel %vm193, %v365, 0.0
    %367 = vadd.xlane.f32.xlu0 %v366
    %v368 = vpop.xlane.xlu0 %367
    %v369 = vrcp.pop %v368
    %v370 = vmul.f32 %v368, %v369
    %v371 = vsub.f32 1.0, %v370
    %v372 = vmul.f32 %v369, %v371
    %v373 = vadd.f32 %v369, %v372
    %vm374 = vweird.f32 %v368
    %vm375 = vweird.f32 %v369
    %vm376 = vmor %vm374, %vm375
    %v377 = vsel %vm376, %v369, %v373
    %v378 = vand.u32 2147483647, %v368
    %vm379 = vcmp.eq.f32.partialorder %v378, 8.507059e+37
    %v380 = vand.u32 %v368, 2147483648
    %v381 = vor.u32 1.1754944e-38, %v380
    %v382 = vsel %vm379, %v381, %v377
    %v383 = vmul.f32 %v365, %v382
    %v384 = vpack.c.bf16 %v383, %v383
    %v385 = vpack.c.bf16 %v157, %v157
    %387 = vrot.lane.b32.xlu0 %v385, 64
    %v388 = vpop.permute.xlu0 %387
    %v390 = vsel %vm193, %v384, 0
    %v393 = vsel %vm226, %v388, 0
    %395 = vmatpush.bf16.msra.mxu0 0
    %396 = vmatpush.bf16.msra.mxu0 0
    %397 = vmatpush.bf16.msra.mxu0 0
    %398 = vmatpush.bf16.msra.mxu0 0
    %399 = vmatpush.bf16.msra.mxu0 0
    %400 = vmatpush.bf16.msra.mxu0 0
    %401 = vmatpush.bf16.msra.mxu0 0
    %402 = vmatpush.bf16.msra.mxu0 %v393
    %403 = vmatmul.bf16.gmra.mxu0 %v390
    %v404 = vpop.f32.mrf.mxu0
    %v405 = vadd.f32 0.0, %v404
    %v406 = vpop.f32.mrf.mxu0
    %407 = vdwg.mxu0
    %408 = vst.msk [vmem:[#allocation2 + $0x8] sm:$0xff] %vm163, %v405
    %409 = vrot.lane.b32.xlu0 %v157, 112
    %v410 = vpop.permute.xlu0 %409
    %411 = vrot.lane.b32.xlu0 %v157, 80
    %v412 = vpop.permute.xlu0 %411
    %v413 = vsel %vm163, %v410, 0
    %v415 = vsel %vm163, %v412, 0
    %417 = vmatpush.xpose.msra.mxu0 0.0
    %418 = vmatpush.xpose.msra.mxu0 0.0
    %419 = vmatpush.xpose.msra.mxu0 0.0
    %420 = vmatpush.xpose.msra.mxu0 0.0
    %421 = vmatpush.xpose.msra.mxu0 0.0
    %422 = vmatpush.xpose.msra.mxu0 0.0
    %423 = vmatpush.xpose.msra.mxu0 0.0
    %424 = vmatpush.xpose.msra.mxu0 0.0
    %425 = vmatpush.xpose.msra.mxu0 0.0
    %426 = vmatpush.xpose.msra.mxu0 0.0
    %427 = vmatpush.xpose.msra.mxu0 0.0
    %428 = vmatpush.xpose.msra.mxu0 0.0
    %429 = vmatpush.xpose.msra.mxu0 0.0
    %430 = vmatpush.xpose.msra.mxu0 0.0
    %431 = vmatpush.xpose.msra.mxu0 0.0
    %432 = vmatpush.xpose.msra.mxu0 %v415
    %433 = vmatmul.f32.gmra.mxu0 %v413
    %v434 = vpop.f32.mrf.mxu0
    %v435 = vadd.f32 0.0, %v434
    %436 = vdwg.mxu0
    %v437 = vmul.f32 %v435, 0.25
    %v438 = vadd.f32 %v437, %v357
    %v439 = vsel %vm193, %v438, -inf
    %440 = vmax.xlane.f32.xlu0 %v439
    %v441 = vpop.xlane.xlu0 %440
    %v442 = vsub.f32 %v438, %v441
    %v443 = vmul.f32 %v442, 1.442695
    %v444 = vpow.pop %v443
    %v445 = vsel %vm193, %v444, 0.0
    %446 = vadd.xlane.f32.xlu0 %v445
    %v447 = vpop.xlane.xlu0 %446
    %v448 = vrcp.pop %v447
    %v449 = vmul.f32 %v447, %v448
    %v450 = vsub.f32 1.0, %v449
    %v451 = vmul.f32 %v448, %v450
    %v452 = vadd.f32 %v448, %v451
    %vm453 = vweird.f32 %v447
    %vm454 = vweird.f32 %v448
    %vm455 = vmor %vm453, %vm454
    %v456 = vsel %vm455, %v448, %v452
    %v457 = vand.u32 2147483647, %v447
    %vm458 = vcmp.eq.f32.partialorder %v457, 8.507059e+37
    %v459 = vand.u32 %v447, 2147483648
    %v460 = vor.u32 1.1754944e-38, %v459
    %v461 = vsel %vm458, %v460, %v456
    %v462 = vmul.f32 %v444, %v461
    %v463 = vpack.c.bf16 %v462, %v462
    %464 = vrot.lane.b32.xlu0 %v385, 48
    %v465 = vpop.permute.xlu0 %464
    %v467 = vsel %vm193, %v463, 0
    %v470 = vsel %vm226, %v465, 0
    %472 = vmatpush.bf16.msra.mxu0 0
    %473 = vmatpush.bf16.msra.mxu0 0
    %474 = vmatpush.bf16.msra.mxu0 0
    %475 = vmatpush.bf16.msra.mxu0 0
    %476 = vmatpush.bf16.msra.mxu0 0
    %477 = vmatpush.bf16.msra.mxu0 0
    %478 = vmatpush.bf16.msra.mxu0 0
    %479 = vmatpush.bf16.msra.mxu0 %v470
    %480 = vmatmul.bf16.gmra.mxu0 %v467
    %v481 = vpop.f32.mrf.mxu0
    %v482 = vadd.f32 0.0, %v481
    %v483 = vpop.f32.mrf.mxu0
    %484 = vdwg.mxu0
    %486 = vrot.lane.b32.xlu0 %v482, 16
    %v487 = vpop.permute.xlu0 %486
    %489 = vst.msk [vmem:[#allocation2 + $0x8] sm:$0xff] %vm324, %v487
    %v490 = vld [vmem:[#allocation2] sm:$0xff]
    %v491 = vld [vmem:[#allocation2 + $0x8] sm:$0xff]
    %v492 = vpack.c.bf16 %v491, %v490
    %v493 = vld [vmem:[%s6] sm:$0xf]
    %v494 = vld [vmem:[%s6 + $0x4] sm:$0xf]
    %v495 = vld [vmem:[%s6 + $0x8] sm:$0xf]
    %v496 = vld [vmem:[%s6 + $0xc] sm:$0xf]
    %v497 = vld [vmem:[%s7] sm:$0x1]
    %v499 = vperm.slane %v497, 0
    %v505 = vunpack.c.l.b16 %v493
    %v506 = vunpack.c.l.b16 %v494
    %v507 = vunpack.c.l.b16 %v495
    %v508 = vunpack.c.l.b16 %v496
    %v509 = vpack.c.b16 %v506, %v505
    %v510 = vpack.c.b16 %v508, %v507
    %v514 = vsel %vm59, %v492, 0
    %516 = vmatpush.bf16.msra.mxu0 0
    %517 = vmatpush.bf16.msra.mxu0 0
    %518 = vmatpush.bf16.msra.mxu0 0
    %519 = vmatpush.bf16.msra.mxu0 0
    %520 = vmatpush.bf16.msra.mxu0 0
    %521 = vmatpush.bf16.msra.mxu0 0
    %522 = vmatpush.bf16.msra.mxu0 %v510
    %523 = vmatpush.bf16.msra.mxu0 %v509
    %524 = vmatmul.bf16.gmra.mxu0 %v514
    %v525 = vpop.f32.mrf.mxu0
    %v526 = vadd.f32 %v499, %v525
    %v527 = vpop.f32.mrf.mxu0
    %v528 = vadd.f32 %v499, %v527
    %529 = vdwg.mxu0
    %v530 = vadd.f32 %v526, %v119
    %v531 = vadd.f32 %v528, %v120
    %v532 = vld [vmem:[%s8] sm:$0x1]
    %v533 = vld [vmem:[%s9] sm:$0x1]
    %v534 = vsel %vm59, %v530, 0.0
    %535 = vadd.xlane.f32.xlu0 %v534
    %v536 = vpop.xlane.xlu0 %535
    %v537 = vsel %vm59, %v531, 0.0
    %538 = vadd.xlane.f32.xlu0 %v537
    %v539 = vpop.xlane.xlu0 %538
    %v540 = vmul.f32 %v536, %v72
    %v541 = vmul.f32 %v539, %v72
    %v542 = vsub.f32 %v530, %v540
    %v543 = vsub.f32 %v531, %v541
    %v544 = vmul.f32 %v542, %v542
    %v545 = vmul.f32 %v543, %v543
    %v546 = vsel %vm59, %v544, 0.0
    %547 = vadd.xlane.f32.xlu0 %v546
    %v548 = vpop.xlane.xlu0 %547
    %v549 = vsel %vm59, %v545, 0.0
    %550 = vadd.xlane.f32.xlu0 %v549
    %v551 = vpop.xlane.xlu0 %550
    %v552 = vmul.f32 %v548, %v72
    %v553 = vmul.f32 %v551, %v72
    %v554 = vadd.f32 %v552, 1e-12
    %v555 = vadd.f32 %v553, 1e-12
    %v556 = vrsqrt.pop %v554
    %v557 = vmul.f32 %v556, %v554
    %v558 = vmul.f32 %v557, %v556
    %v559 = vmul.f32 0.5, %v558
    %v560 = vsub.f32 1.5, %v559
    %v561 = vmul.f32 %v556, %v560
    %vm562 = vweird.f32 %v554
    %vm563 = vweird.f32 %v556
    %vm564 = vmor %vm562, %vm563
    %v565 = vsel %vm564, %v556, %v561
    %v566 = vrsqrt.pop %v555
    %v567 = vmul.f32 %v566, %v555
    %v568 = vmul.f32 %v567, %v566
    %v569 = vmul.f32 0.5, %v568
    %v570 = vsub.f32 1.5, %v569
    %v571 = vmul.f32 %v566, %v570
    %vm572 = vweird.f32 %v555
    %vm573 = vweird.f32 %v566
    %vm574 = vmor %vm572, %vm573
    %v575 = vsel %vm574, %v566, %v571
    %v576 = vmul.f32 %v542, %v565
    %v577 = vmul.f32 %v543, %v575
    %v579 = vperm.slane %v532, 0
    %v581 = vmul.f32 %v576, %v579
    %v582 = vmul.f32 %v577, %v579
    %v584 = vperm.slane %v533, 0
    %v586 = vadd.f32 %v581, %v584
    %v587 = vadd.f32 %v582, %v584
    %v588 = vpack.c.bf16 %v587, %v586
    %v589 = vld [vmem:[%s10] sm:$0xf]
    %v590 = vld [vmem:[%s10 + $0x4] sm:$0xf]
    %v591 = vld [vmem:[%s10 + $0x8] sm:$0xf]
    %v592 = vld [vmem:[%s10 + $0xc] sm:$0xf]
    %v593 = vld [vmem:[%s11] sm:$0x1]
    %v595 = vperm.slane %v593, 0
    %v601 = vunpack.c.l.b16 %v589
    %v602 = vunpack.c.l.b16 %v590
    %v603 = vunpack.c.l.b16 %v591
    %v604 = vunpack.c.l.b16 %v592
    %v605 = vpack.c.b16 %v602, %v601
    %v606 = vpack.c.b16 %v604, %v603
    %v610 = vsel %vm59, %v588, 0
    %612 = vmatpush.bf16.msra.mxu0 0
    %613 = vmatpush.bf16.msra.mxu0 0
    %614 = vmatpush.bf16.msra.mxu0 0
    %615 = vmatpush.bf16.msra.mxu0 0
    %616 = vmatpush.bf16.msra.mxu0 0
    %617 = vmatpush.bf16.msra.mxu0 0
    %618 = vmatpush.bf16.msra.mxu0 %v606
    %619 = vmatpush.bf16.msra.mxu0 %v605
    %620 = vmatmul.bf16.gmra.mxu0 %v610
    %v621 = vpop.f32.mrf.mxu0
    %v622 = vadd.f32 %v595, %v621
    %v623 = vpop.f32.mrf.mxu0
    %v624 = vadd.f32 %v595, %v623
    %625 = vdwg.mxu0
    %v626 = vmul.f32 %v622, 0.5
    %v627 = vmul.f32 %v624, 0.5
    %v628 = vmul.f32 %v622, 0.044715
    %v629 = vmul.f32 %v624, 0.044715
    %v630 = vmul.f32 %v628, %v622
    %v631 = vmul.f32 %v629, %v624
    %v632 = vmul.f32 %v630, %v622
    %v633 = vmul.f32 %v631, %v624
    %v634 = vadd.f32 %v622, %v632
    %v635 = vadd.f32 %v624, %v633
    %v636 = vmul.f32 %v634, 0.7978846
    %v637 = vmul.f32 %v635, 0.7978846
    %v638 = vtanh.pop %v636
    %v639 = vtanh.pop %v637
    %v640 = vadd.f32 %v638, 1.0
    %v641 = vadd.f32 %v639, 1.0
    %v642 = vmul.f32 %v626, %v640
    %v643 = vmul.f32 %v627, %v641
    %v644 = vpack.c.bf16 %v643, %v642
    %v645 = vld [vmem:[%s12] sm:$0xf]
    %v646 = vld [vmem:[%s12 + $0x4] sm:$0xf]
    %v647 = vld [vmem:[%s12 + $0x8] sm:$0xf]
    %v648 = vld [vmem:[%s12 + $0xc] sm:$0xf]
    %v649 = vld [vmem:[%s12 + $0x10] sm:$0xf]
    %v650 = vld [vmem:[%s12 + $0x14] sm:$0xf]
    %v651 = vld [vmem:[%s12 + $0x18] sm:$0xf]
    %v652 = vld [vmem:[%s12 + $0x1c] sm:$0xf]
    %v653 = vld [vmem:[%s13] sm:$0x1]
    %v655 = vperm.slane %v653, 0
    %v665 = vunpack.c.l.b16 %v645
    %v666 = vunpack.c.l.b16 %v646
    %v667 = vunpack.c.l.b16 %v647
    %v668 = vunpack.c.l.b16 %v648
    %v669 = vunpack.c.l.b16 %v649
    %v670 = vunpack.c.l.b16 %v650
    %v671 = vunpack.c.l.b16 %v651
    %v672 = vunpack.c.l.b16 %v652
    %v673 = vpack.c.b16 %v666, %v665
    %v674 = vpack.c.b16 %v668, %v667
    %v675 = vpack.c.b16 %v670, %v669
    %v676 = vpack.c.b16 %v672, %v671
    %vm681 = vcmask 523264
    %v683 = vsel %vm681, %v644, 0
    %685 = vmatpush.bf16.msra.mxu0 0
    %686 = vmatpush.bf16.msra.mxu0 0
    %687 = vmatpush.bf16.msra.mxu0 0
    %688 = vmatpush.bf16.msra.mxu0 0
    %689 = vmatpush.bf16.msra.mxu0 %v676
    %690 = vmatpush.bf16.msra.mxu0 %v675
    %691 = vmatpush.bf16.msra.mxu0 %v674
    %692 = vmatpush.bf16.msra.mxu0 %v673
    %693 = vmatmul.bf16.gmra.mxu0 %v683
    %v694 = vpop.f32.mrf.mxu0
    %v695 = vadd.f32 %v655, %v694
    %v696 = vpop.f32.mrf.mxu0
    %v697 = vadd.f32 %v655, %v696
    %698 = vdwg.mxu0
    %v699 = vadd.f32 %v695, %v586
    %v700 = vadd.f32 %v697, %v587
    %v701 = vld [vmem:[%s14] sm:$0x1]
    %v702 = vld [vmem:[%s15] sm:$0x1]
    %v703 = vsel %vm59, %v699, 0.0
    %704 = vadd.xlane.f32.xlu0 %v703
    %v705 = vpop.xlane.xlu0 %704
    %v706 = vsel %vm59, %v700, 0.0
    %707 = vadd.xlane.f32.xlu0 %v706
    %v708 = vpop.xlane.xlu0 %707
    %v709 = vmul.f32 %v705, %v72
    %v710 = vmul.f32 %v708, %v72
    %v711 = vsub.f32 %v699, %v709
    %v712 = vsub.f32 %v700, %v710
    %v713 = vmul.f32 %v711, %v711
    %v714 = vmul.f32 %v712, %v712
    %v715 = vsel %vm59, %v713, 0.0
    %716 = vadd.xlane.f32.xlu0 %v715
    %v717 = vpop.xlane.xlu0 %716
    %v718 = vsel %vm59, %v714, 0.0
    %719 = vadd.xlane.f32.xlu0 %v718
    %v720 = vpop.xlane.xlu0 %719
    %v721 = vmul.f32 %v717, %v72
    %v722 = vmul.f32 %v720, %v72
    %v723 = vadd.f32 %v721, 1e-12
    %v724 = vadd.f32 %v722, 1e-12
    %v725 = vrsqrt.pop %v723
    %v726 = vmul.f32 %v725, %v723
    %v727 = vmul.f32 %v726, %v725
    %v728 = vmul.f32 0.5, %v727
    %v729 = vsub.f32 1.5, %v728
    %v730 = vmul.f32 %v725, %v729
    %vm731 = vweird.f32 %v723
    %vm732 = vweird.f32 %v725
    %vm733 = vmor %vm731, %vm732
    %v734 = vsel %vm733, %v725, %v730
    %v735 = vrsqrt.pop %v724
    %v736 = vmul.f32 %v735, %v724
    %v737 = vmul.f32 %v736, %v735
    %v738 = vmul.f32 0.5, %v737
    %v739 = vsub.f32 1.5, %v738
    %v740 = vmul.f32 %v735, %v739
    %vm741 = vweird.f32 %v724
    %vm742 = vweird.f32 %v735
    %vm743 = vmor %vm741, %vm742
    %v744 = vsel %vm743, %v735, %v740
    %v745 = vmul.f32 %v711, %v734
    %v746 = vmul.f32 %v712, %v744
    %v748 = vperm.slane %v701, 0
    %v750 = vmul.f32 %v745, %v748
    %v751 = vmul.f32 %v746, %v748
    %v753 = vperm.slane %v702, 0
    %v755 = vadd.f32 %v750, %v753
    %v756 = vadd.f32 %v751, %v753
    %v757 = vpack.c.bf16 %v756, %v755
    %s758 = scalar_lea.vmem %s4, 16
    %v759 = vld [vmem:[%s758] sm:$0xf]
    %v760 = vld [vmem:[%s758 + $0x4] sm:$0xf]
    %v761 = vld [vmem:[%s758 + $0x8] sm:$0xf]
    %v762 = vld [vmem:[%s758 + $0xc] sm:$0xf]
    %s763 = scalar_lea.vmem %s5, 1
    %v764 = vld [vmem:[%s763] sm:$0x1]
    %v766 = vperm.slane %v764, 0
    %v772 = vunpack.c.l.b16 %v759
    %v773 = vunpack.c.l.b16 %v760
    %v774 = vunpack.c.l.b16 %v761
    %v775 = vunpack.c.l.b16 %v762
    %v776 = vpack.c.b16 %v773, %v772
    %v777 = vpack.c.b16 %v775, %v774
    %v781 = vsel %vm59, %v757, 0
    %783 = vmatpush.bf16.msra.mxu0 0
    %784 = vmatpush.bf16.msra.mxu0 0
    %785 = vmatpush.bf16.msra.mxu0 0
    %786 = vmatpush.bf16.msra.mxu0 0
    %787 = vmatpush.bf16.msra.mxu0 0
    %788 = vmatpush.bf16.msra.mxu0 0
    %789 = vmatpush.bf16.msra.mxu0 %v777
    %790 = vmatpush.bf16.msra.mxu0 %v776
    %791 = vmatmul.bf16.gmra.mxu0 %v781
    %v792 = vpop.f32.mrf.mxu0
    %v793 = vadd.f32 %v766, %v792
    %v794 = vpop.f32.mrf.mxu0
    %v795 = vadd.f32 %v766, %v794
    %796 = vdwg.mxu0
    %v797 = vld [vmem:[%s1] sm:$0x1]
    %799 = vrot.lane.b32.xlu0 %v793, 96
    %v800 = vpop.permute.xlu0 %799
    %v801 = vsel %vm163, %v793, 0
    %v803 = vsel %vm163, %v800, 0
    %805 = vmatpush.xpose.msra.mxu0 0.0
    %806 = vmatpush.xpose.msra.mxu0 0.0
    %807 = vmatpush.xpose.msra.mxu0 0.0
    %808 = vmatpush.xpose.msra.mxu0 0.0
    %809 = vmatpush.xpose.msra.mxu0 0.0
    %810 = vmatpush.xpose.msra.mxu0 0.0
    %811 = vmatpush.xpose.msra.mxu0 0.0
    %812 = vmatpush.xpose.msra.mxu0 0.0
    %813 = vmatpush.xpose.msra.mxu0 0.0
    %814 = vmatpush.xpose.msra.mxu0 0.0
    %815 = vmatpush.xpose.msra.mxu0 0.0
    %816 = vmatpush.xpose.msra.mxu0 0.0
    %817 = vmatpush.xpose.msra.mxu0 0.0
    %818 = vmatpush.xpose.msra.mxu0 0.0
    %819 = vmatpush.xpose.msra.mxu0 0.0
    %820 = vmatpush.xpose.msra.mxu0 %v803
    %821 = vmatmul.f32.gmra.mxu0 %v801
    %v822 = vpop.f32.mrf.mxu0
    %v823 = vadd.f32 0.0, %v822
    %824 = vdwg.mxu0
    %v825 = vmul.f32 %v823, 0.25
    %v827 = vperm.slane %v797, 0
    %v829 = vadd.f32 %v825, %v827
    %v830 = vsel %vm193, %v829, -inf
    %831 = vmax.xlane.f32.xlu0 %v830
    %v832 = vpop.xlane.xlu0 %831
    %v833 = vsub.f32 %v829, %v832
    %v834 = vmul.f32 %v833, 1.442695
    %v835 = vpow.pop %v834
    %v836 = vsel %vm193, %v835, 0.0
    %837 = vadd.xlane.f32.xlu0 %v836
    %v838 = vpop.xlane.xlu0 %837
    %v839 = vrcp.pop %v838
    %v840 = vmul.f32 %v838, %v839
    %v841 = vsub.f32 1.0, %v840
    %v842 = vmul.f32 %v839, %v841
    %v843 = vadd.f32 %v839, %v842
    %vm844 = vweird.f32 %v838
    %vm845 = vweird.f32 %v839
    %vm846 = vmor %vm844, %vm845
    %v847 = vsel %vm846, %v839, %v843
    %v848 = vand.u32 2147483647, %v838
    %vm849 = vcmp.eq.f32.partialorder %v848, 8.507059e+37
    %v850 = vand.u32 %v838, 2147483648
    %v851 = vor.u32 1.1754944e-38, %v850
    %v852 = vsel %vm849, %v851, %v847
    %v853 = vmul.f32 %v835, %v852
    %v854 = vpack.c.bf16 %v853, %v853
    %v855 = vpack.c.bf16 %v793, %v793
    %857 = vrot.lane.b32.xlu0 %v855, 64
    %v858 = vpop.permute.xlu0 %857
    %v860 = vsel %vm193, %v854, 0
    %v863 = vsel %vm226, %v858, 0
    %865 = vmatpush.bf16.msra.mxu0 0
    %866 = vmatpush.bf16.msra.mxu0 0
    %867 = vmatpush.bf16.msra.mxu0 0
    %868 = vmatpush.bf16.msra.mxu0 0
    %869 = vmatpush.bf16.msra.mxu0 0
    %870 = vmatpush.bf16.msra.mxu0 0
    %871 = vmatpush.bf16.msra.mxu0 0
    %872 = vmatpush.bf16.msra.mxu0 %v863
    %873 = vmatmul.bf16.gmra.mxu0 %v860
    %v874 = vpop.f32.mrf.mxu0
    %v875 = vadd.f32 0.0, %v874
    %v876 = vpop.f32.mrf.mxu0
    %877 = vdwg.mxu0
    %878 = vst.msk [vmem:[#allocation2] sm:$0xff] %vm163, %v875
    %879 = vrot.lane.b32.xlu0 %v793, 112
    %v880 = vpop.permute.xlu0 %879
    %881 = vrot.lane.b32.xlu0 %v793, 80
    %v882 = vpop.permute.xlu0 %881
    %v883 = vsel %vm163, %v880, 0
    %v885 = vsel %vm163, %v882, 0
    %887 = vmatpush.xpose.msra.mxu0 0.0
    %888 = vmatpush.xpose.msra.mxu0 0.0
    %889 = vmatpush.xpose.msra.mxu0 0.0
    %890 = vmatpush.xpose.msra.mxu0 0.0
    %891 = vmatpush.xpose.msra.mxu0 0.0
    %892 = vmatpush.xpose.msra.mxu0 0.0
    %893 = vmatpush.xpose.msra.mxu0 0.0
    %894 = vmatpush.xpose.msra.mxu0 0.0
    %895 = vmatpush.xpose.msra.mxu0 0.0
    %896 = vmatpush.xpose.msra.mxu0 0.0
    %897 = vmatpush.xpose.msra.mxu0 0.0
    %898 = vmatpush.xpose.msra.mxu0 0.0
    %899 = vmatpush.xpose.msra.mxu0 0.0
    %900 = vmatpush.xpose.msra.mxu0 0.0
    %901 = vmatpush.xpose.msra.mxu0 0.0
    %902 = vmatpush.xpose.msra.mxu0 %v885
    %903 = vmatmul.f32.gmra.mxu0 %v883
    %v904 = vpop.f32.mrf.mxu0
    %v905 = vadd.f32 0.0, %v904
    %906 = vdwg.mxu0
    %v907 = vmul.f32 %v905, 0.25
    %v908 = vadd.f32 %v907, %v827
    %v909 = vsel %vm193, %v908, -inf
    %910 = vmax.xlane.f32.xlu0 %v909
    %v911 = vpop.xlane.xlu0 %910
    %v912 = vsub.f32 %v908, %v911
    %v913 = vmul.f32 %v912, 1.442695
    %v914 = vpow.pop %v913
    %v915 = vsel %vm193, %v914, 0.0
    %916 = vadd.xlane.f32.xlu0 %v915
    %v917 = vpop.xlane.xlu0 %916
    %v918 = vrcp.pop %v917
    %v919 = vmul.f32 %v917, %v918
    %v920 = vsub.f32 1.0, %v919
    %v921 = vmul.f32 %v918, %v920
    %v922 = vadd.f32 %v918, %v921
    %vm923 = vweird.f32 %v917
    %vm924 = vweird.f32 %v918
    %vm925 = vmor %vm923, %vm924
    %v926 = vsel %vm925, %v918, %v922
    %v927 = vand.u32 2147483647, %v917
    %vm928 = vcmp.eq.f32.partialorder %v927, 8.507059e+37
    %v929 = vand.u32 %v917, 2147483648
    %v930 = vor.u32 1.1754944e-38, %v929
    %v931 = vsel %vm928, %v930, %v926
    %v932 = vmul.f32 %v914, %v931
    %v933 = vpack.c.bf16 %v932, %v932
    %934 = vrot.lane.b32.xlu0 %v855, 48
    %v935 = vpop.permute.xlu0 %934
    %v937 = vsel %vm193, %v933, 0
    %v940 = vsel %vm226, %v935, 0
    %942 = vmatpush.bf16.msra.mxu0 0
    %943 = vmatpush.bf16.msra.mxu0 0
    %944 = vmatpush.bf16.msra.mxu0 0
    %945 = vmatpush.bf16.msra.mxu0 0
    %946 = vmatpush.bf16.msra.mxu0 0
    %947 = vmatpush.bf16.msra.mxu0 0
    %948 = vmatpush.bf16.msra.mxu0 0
    %949 = vmatpush.bf16.msra.mxu0 %v940
    %950 = vmatmul.bf16.gmra.mxu0 %v937
    %v951 = vpop.f32.mrf.mxu0
    %v952 = vadd.f32 0.0, %v951
    %v953 = vpop.f32.mrf.mxu0
    %954 = vdwg.mxu0
    %956 = vrot.lane.b32.xlu0 %v952, 16
    %v957 = vpop.permute.xlu0 %956
    %959 = vst.msk [vmem:[#allocation2] sm:$0xff] %vm324, %v957
    %v960 = vld [vmem:[%s326] sm:$0x1]
    %962 = vrot.lane.b32.xlu0 %v795, 96
    %v963 = vpop.permute.xlu0 %962
    %v964 = vsel %vm163, %v795, 0
    %v966 = vsel %vm163, %v963, 0
    %968 = vmatpush.xpose.msra.mxu0 0.0
    %969 = vmatpush.xpose.msra.mxu0 0.0
    %970 = vmatpush.xpose.msra.mxu0 0.0
    %971 = vmatpush.xpose.msra.mxu0 0.0
    %972 = vmatpush.xpose.msra.mxu0 0.0
    %973 = vmatpush.xpose.msra.mxu0 0.0
    %974 = vmatpush.xpose.msra.mxu0 0.0
    %975 = vmatpush.xpose.msra.mxu0 0.0
    %976 = vmatpush.xpose.msra.mxu0 0.0
    %977 = vmatpush.xpose.msra.mxu0 0.0
    %978 = vmatpush.xpose.msra.mxu0 0.0
    %979 = vmatpush.xpose.msra.mxu0 0.0
    %980 = vmatpush.xpose.msra.mxu0 0.0
    %981 = vmatpush.xpose.msra.mxu0 0.0
    %982 = vmatpush.xpose.msra.mxu0 0.0
    %983 = vmatpush.xpose.msra.mxu0 %v966
    %984 = vmatmul.f32.gmra.mxu0 %v964
    %v985 = vpop.f32.mrf.mxu0
    %v986 = vadd.f32 0.0, %v985
    %987 = vdwg.mxu0
    %v988 = vmul.f32 %v986, 0.25
    %v990 = vperm.slane %v960, 0
    %v992 = vadd.f32 %v988, %v990
    %v993 = vsel %vm193, %v992, -inf
    %994 = vmax.xlane.f32.xlu0 %v993
    %v995 = vpop.xlane.xlu0 %994
    %v996 = vsub.f32 %v992, %v995
    %v997 = vmul.f32 %v996, 1.442695
    %v998 = vpow.pop %v997
    %v999 = vsel %vm193, %v998, 0.0
    %1000 = vadd.xlane.f32.xlu0 %v999
    %v1001 = vpop.xlane.xlu0 %1000
    %v1002 = vrcp.pop %v1001
    %v1003 = vmul.f32 %v1001, %v1002
    %v1004 = vsub.f32 1.0, %v1003
    %v1005 = vmul.f32 %v1002, %v1004
    %v1006 = vadd.f32 %v1002, %v1005
    %vm1007 = vweird.f32 %v1001
    %vm1008 = vweird.f32 %v1002
    %vm1009 = vmor %vm1007, %vm1008
    %v1010 = vsel %vm1009, %v1002, %v1006
    %v1011 = vand.u32 2147483647, %v1001
    %vm1012 = vcmp.eq.f32.partialorder %v1011, 8.507059e+37
    %v1013 = vand.u32 %v1001, 2147483648
    %v1014 = vor.u32 1.1754944e-38, %v1013
    %v1015 = vsel %vm1012, %v1014, %v1010
    %v1016 = vmul.f32 %v998, %v1015
    %v1017 = vpack.c.bf16 %v1016, %v1016
    %v1018 = vpack.c.bf16 %v795, %v795
    %1020 = vrot.lane.b32.xlu0 %v1018, 64
    %v1021 = vpop.permute.xlu0 %1020
    %v1023 = vsel %vm193, %v1017, 0
    %v1026 = vsel %vm226, %v1021, 0
    %1028 = vmatpush.bf16.msra.mxu0 0
    %1029 = vmatpush.bf16.msra.mxu0 0
    %1030 = vmatpush.bf16.msra.mxu0 0
    %1031 = vmatpush.bf16.msra.mxu0 0
    %1032 = vmatpush.bf16.msra.mxu0 0
    %1033 = vmatpush.bf16.msra.mxu0 0
    %1034 = vmatpush.bf16.msra.mxu0 0
    %1035 = vmatpush.bf16.msra.mxu0 %v1026
    %1036 = vmatmul.bf16.gmra.mxu0 %v1023
    %v1037 = vpop.f32.mrf.mxu0
    %v1038 = vadd.f32 0.0, %v1037
    %v1039 = vpop.f32.mrf.mxu0
    %1040 = vdwg.mxu0
    %1041 = vst.msk [vmem:[#allocation2 + $0x8] sm:$0xff] %vm163, %v1038
    %1042 = vrot.lane.b32.xlu0 %v795, 112
    %v1043 = vpop.permute.xlu0 %1042
    %1044 = vrot.lane.b32.xlu0 %v795, 80
    %v1045 = vpop.permute.xlu0 %1044
    %v1046 = vsel %vm163, %v1043, 0
    %v1048 = vsel %vm163, %v1045, 0
    %1050 = vmatpush.xpose.msra.mxu0 0.0
    %1051 = vmatpush.xpose.msra.mxu0 0.0
    %1052 = vmatpush.xpose.msra.mxu0 0.0
    %1053 = vmatpush.xpose.msra.mxu0 0.0
    %1054 = vmatpush.xpose.msra.mxu0 0.0
    %1055 = vmatpush.xpose.msra.mxu0 0.0
    %1056 = vmatpush.xpose.msra.mxu0 0.0
    %1057 = vmatpush.xpose.msra.mxu0 0.0
    %1058 = vmatpush.xpose.msra.mxu0 0.0
    %1059 = vmatpush.xpose.msra.mxu0 0.0
    %1060 = vmatpush.xpose.msra.mxu0 0.0
    %1061 = vmatpush.xpose.msra.mxu0 0.0
    %1062 = vmatpush.xpose.msra.mxu0 0.0
    %1063 = vmatpush.xpose.msra.mxu0 0.0
    %1064 = vmatpush.xpose.msra.mxu0 0.0
    %1065 = vmatpush.xpose.msra.mxu0 %v1048
    %1066 = vmatmul.f32.gmra.mxu0 %v1046
    %v1067 = vpop.f32.mrf.mxu0
    %v1068 = vadd.f32 0.0, %v1067
    %1069 = vdwg.mxu0
    %v1070 = vmul.f32 %v1068, 0.25
    %v1071 = vadd.f32 %v1070, %v990
    %v1072 = vsel %vm193, %v1071, -inf
    %1073 = vmax.xlane.f32.xlu0 %v1072
    %v1074 = vpop.xlane.xlu0 %1073
    %v1075 = vsub.f32 %v1071, %v1074
    %v1076 = vmul.f32 %v1075, 1.442695
    %v1077 = vpow.pop %v1076
    %v1078 = vsel %vm193, %v1077, 0.0
    %1079 = vadd.xlane.f32.xlu0 %v1078
    %v1080 = vpop.xlane.xlu0 %1079
    %v1081 = vrcp.pop %v1080
    %v1082 = vmul.f32 %v1080, %v1081
    %v1083 = vsub.f32 1.0, %v1082
    %v1084 = vmul.f32 %v1081, %v1083
    %v1085 = vadd.f32 %v1081, %v1084
    %vm1086 = vweird.f32 %v1080
    %vm1087 = vweird.f32 %v1081
    %vm1088 = vmor %vm1086, %vm1087
    %v1089 = vsel %vm1088, %v1081, %v1085
    %v1090 = vand.u32 2147483647, %v1080
    %vm1091 = vcmp.eq.f32.partialorder %v1090, 8.507059e+37
    %v1092 = vand.u32 %v1080, 2147483648
    %v1093 = vor.u32 1.1754944e-38, %v1092
    %v1094 = vsel %vm1091, %v1093, %v1089
    %v1095 = vmul.f32 %v1077, %v1094
    %v1096 = vpack.c.bf16 %v1095, %v1095
    %1097 = vrot.lane.b32.xlu0 %v1018, 48
    %v1098 = vpop.permute.xlu0 %1097
    %v1100 = vsel %vm193, %v1096, 0
    %v1103 = vsel %vm226, %v1098, 0
    %1105 = vmatpush.bf16.msra.mxu0 0
    %1106 = vmatpush.bf16.msra.mxu0 0
    %1107 = vmatpush.bf16.msra.mxu0 0
    %1108 = vmatpush.bf16.msra.mxu0 0
    %1109 = vmatpush.bf16.msra.mxu0 0
    %1110 = vmatpush.bf16.msra.mxu0 0
    %1111 = vmatpush.bf16.msra.mxu0 0
    %1112 = vmatpush.bf16.msra.mxu0 %v1103
    %1113 = vmatmul.bf16.gmra.mxu0 %v1100
    %v1114 = vpop.f32.mrf.mxu0
    %v1115 = vadd.f32 0.0, %v1114
    %v1116 = vpop.f32.mrf.mxu0
    %1117 = vdwg.mxu0
    %1119 = vrot.lane.b32.xlu0 %v1115, 16
    %v1120 = vpop.permute.xlu0 %1119
    %1122 = vst.msk [vmem:[#allocation2 + $0x8] sm:$0xff] %vm324, %v1120
    %v1123 = vld [vmem:[#allocation2] sm:$0xff]
    %v1124 = vld [vmem:[#allocation2 + $0x8] sm:$0xff]
    %v1125 = vpack.c.bf16 %v1124, %v1123
    %s1126 = scalar_lea.vmem %s6, 16
    %v1127 = vld [vmem:[%s1126] sm:$0xf]
    %v1128 = vld [vmem:[%s1126 + $0x4] sm:$0xf]
    %v1129 = vld [vmem:[%s1126 + $0x8] sm:$0xf]
    %v1130 = vld [vmem:[%s1126 + $0xc] sm:$0xf]
    %s1131 = scalar_lea.vmem %s7, 1
    %v1132 = vld [vmem:[%s1131] sm:$0x1]
    %v1134 = vperm.slane %v1132, 0
    %v1140 = vunpack.c.l.b16 %v1127
    %v1141 = vunpack.c.l.b16 %v1128
    %v1142 = vunpack.c.l.b16 %v1129
    %v1143 = vunpack.c.l.b16 %v1130
    %v1144 = vpack.c.b16 %v1141, %v1140
    %v1145 = vpack.c.b16 %v1143, %v1142
    %v1149 = vsel %vm59, %v1125, 0
    %1151 = vmatpush.bf16.msra.mxu0 0
    %1152 = vmatpush.bf16.msra.mxu0 0
    %1153 = vmatpush.bf16.msra.mxu0 0
    %1154 = vmatpush.bf16.msra.mxu0 0
    %1155 = vmatpush.bf16.msra.mxu0 0
    %1156 = vmatpush.bf16.msra.mxu0 0
    %1157 = vmatpush.bf16.msra.mxu0 %v1145
    %1158 = vmatpush.bf16.msra.mxu0 %v1144
    %1159 = vmatmul.bf16.gmra.mxu0 %v1149
    %v1160 = vpop.f32.mrf.mxu0
    %v1161 = vadd.f32 %v1134, %v1160
    %v1162 = vpop.f32.mrf.mxu0
    %v1163 = vadd.f32 %v1134, %v1162
    %1164 = vdwg.mxu0
    %v1165 = vadd.f32 %v1161, %v755
    %v1166 = vadd.f32 %v1163, %v756
    %s1167 = scalar_lea.vmem %s8, 1
    %v1168 = vld [vmem:[%s1167] sm:$0x1]
    %s1169 = scalar_lea.vmem %s9, 1
    %v1170 = vld [vmem:[%s1169] sm:$0x1]
    %v1171 = vsel %vm59, %v1165, 0.0
    %1172 = vadd.xlane.f32.xlu0 %v1171
    %v1173 = vpop.xlane.xlu0 %1172
    %v1174 = vsel %vm59, %v1166, 0.0
    %1175 = vadd.xlane.f32.xlu0 %v1174
    %v1176 = vpop.xlane.xlu0 %1175
    %v1177 = vmul.f32 %v1173, %v72
    %v1178 = vmul.f32 %v1176, %v72
    %v1179 = vsub.f32 %v1165, %v1177
    %v1180 = vsub.f32 %v1166, %v1178
    %v1181 = vmul.f32 %v1179, %v1179
    %v1182 = vmul.f32 %v1180, %v1180
    %v1183 = vsel %vm59, %v1181, 0.0
    %1184 = vadd.xlane.f32.xlu0 %v1183
    %v1185 = vpop.xlane.xlu0 %1184
    %v1186 = vsel %vm59, %v1182, 0.0
    %1187 = vadd.xlane.f32.xlu0 %v1186
    %v1188 = vpop.xlane.xlu0 %1187
    %v1189 = vmul.f32 %v1185, %v72
    %v1190 = vmul.f32 %v1188, %v72
    %v1191 = vadd.f32 %v1189, 1e-12
    %v1192 = vadd.f32 %v1190, 1e-12
    %v1193 = vrsqrt.pop %v1191
    %v1194 = vmul.f32 %v1193, %v1191
    %v1195 = vmul.f32 %v1194, %v1193
    %v1196 = vmul.f32 0.5, %v1195
    %v1197 = vsub.f32 1.5, %v1196
    %v1198 = vmul.f32 %v1193, %v1197
    %vm1199 = vweird.f32 %v1191
    %vm1200 = vweird.f32 %v1193
    %vm1201 = vmor %vm1199, %vm1200
    %v1202 = vsel %vm1201, %v1193, %v1198
    %v1203 = vrsqrt.pop %v1192
    %v1204 = vmul.f32 %v1203, %v1192
    %v1205 = vmul.f32 %v1204, %v1203
    %v1206 = vmul.f32 0.5, %v1205
    %v1207 = vsub.f32 1.5, %v1206
    %v1208 = vmul.f32 %v1203, %v1207
    %vm1209 = vweird.f32 %v1192
    %vm1210 = vweird.f32 %v1203
    %vm1211 = vmor %vm1209, %vm1210
    %v1212 = vsel %vm1211, %v1203, %v1208
    %v1213 = vmul.f32 %v1179, %v1202
    %v1214 = vmul.f32 %v1180, %v1212
    %v1216 = vperm.slane %v1168, 0
    %v1218 = vmul.f32 %v1213, %v1216
    %v1219 = vmul.f32 %v1214, %v1216
    %v1221 = vperm.slane %v1170, 0
    %v1223 = vadd.f32 %v1218, %v1221
    %v1224 = vadd.f32 %v1219, %v1221
    %v1225 = vpack.c.bf16 %v1224, %v1223
    %s1226 = scalar_lea.vmem %s10, 16
    %v1227 = vld [vmem:[%s1226] sm:$0xf]
    %v1228 = vld [vmem:[%s1226 + $0x4] sm:$0xf]
    %v1229 = vld [vmem:[%s1226 + $0x8] sm:$0xf]
    %v1230 = vld [vmem:[%s1226 + $0xc] sm:$0xf]
    %s1231 = scalar_lea.vmem %s11, 1
    %v1232 = vld [vmem:[%s1231] sm:$0x1]
    %v1234 = vperm.slane %v1232, 0
    %v1240 = vunpack.c.l.b16 %v1227
    %v1241 = vunpack.c.l.b16 %v1228
    %v1242 = vunpack.c.l.b16 %v1229
    %v1243 = vunpack.c.l.b16 %v1230
    %v1244 = vpack.c.b16 %v1241, %v1240
    %v1245 = vpack.c.b16 %v1243, %v1242
    %v1249 = vsel %vm59, %v1225, 0
    %1251 = vmatpush.bf16.msra.mxu0 0
    %1252 = vmatpush.bf16.msra.mxu0 0
    %1253 = vmatpush.bf16.msra.mxu0 0
    %1254 = vmatpush.bf16.msra.mxu0 0
    %1255 = vmatpush.bf16.msra.mxu0 0
    %1256 = vmatpush.bf16.msra.mxu0 0
    %1257 = vmatpush.bf16.msra.mxu0 %v1245
    %1258 = vmatpush.bf16.msra.mxu0 %v1244
    %1259 = vmatmul.bf16.gmra.mxu0 %v1249
    %v1260 = vpop.f32.mrf.mxu0
    %v1261 = vadd.f32 %v1234, %v1260
    %v1262 = vpop.f32.mrf.mxu0
    %v1263 = vadd.f32 %v1234, %v1262
    %1264 = vdwg.mxu0
    %v1265 = vmul.f32 %v1261, 0.5
    %v1266 = vmul.f32 %v1263, 0.5
    %v1267 = vmul.f32 %v1261, 0.044715
    %v1268 = vmul.f32 %v1263, 0.044715
    %v1269 = vmul.f32 %v1267, %v1261
    %v1270 = vmul.f32 %v1268, %v1263
    %v1271 = vmul.f32 %v1269, %v1261
    %v1272 = vmul.f32 %v1270, %v1263
    %v1273 = vadd.f32 %v1261, %v1271
    %v1274 = vadd.f32 %v1263, %v1272
    %v1275 = vmul.f32 %v1273, 0.7978846
    %v1276 = vmul.f32 %v1274, 0.7978846
    %v1277 = vtanh.pop %v1275
    %v1278 = vtanh.pop %v1276
    %v1279 = vadd.f32 %v1277, 1.0
    %v1280 = vadd.f32 %v1278, 1.0
    %v1281 = vmul.f32 %v1265, %v1279
    %v1282 = vmul.f32 %v1266, %v1280
    %v1283 = vpack.c.bf16 %v1282, %v1281
    %s1284 = scalar_lea.vmem %s12, 32
    %v1285 = vld [vmem:[%s1284] sm:$0xf]
    %v1286 = vld [vmem:[%s1284 + $0x4] sm:$0xf]
    %v1287 = vld [vmem:[%s1284 + $0x8] sm:$0xf]
    %v1288 = vld [vmem:[%s1284 + $0xc] sm:$0xf]
    %v1289 = vld [vmem:[%s1284 + $0x10] sm:$0xf]
    %v1290 = vld [vmem:[%s1284 + $0x14] sm:$0xf]
    %v1291 = vld [vmem:[%s1284 + $0x18] sm:$0xf]
    %v1292 = vld [vmem:[%s1284 + $0x1c] sm:$0xf]
    %s1293 = scalar_lea.vmem %s13, 1
    %v1294 = vld [vmem:[%s1293] sm:$0x1]
    %v1296 = vperm.slane %v1294, 0
    %v1306 = vunpack.c.l.b16 %v1285
    %v1307 = vunpack.c.l.b16 %v1286
    %v1308 = vunpack.c.l.b16 %v1287
    %v1309 = vunpack.c.l.b16 %v1288
    %v1310 = vunpack.c.l.b16 %v1289
    %v1311 = vunpack.c.l.b16 %v1290
    %v1312 = vunpack.c.l.b16 %v1291
    %v1313 = vunpack.c.l.b16 %v1292
    %v1314 = vpack.c.b16 %v1307, %v1306
    %v1315 = vpack.c.b16 %v1309, %v1308
    %v1316 = vpack.c.b16 %v1311, %v1310
    %v1317 = vpack.c.b16 %v1313, %v1312
    %v1323 = vsel %vm681, %v1283, 0
    %1325 = vmatpush.bf16.msra.mxu0 0
    %1326 = vmatpush.bf16.msra.mxu0 0
    %1327 = vmatpush.bf16.msra.mxu0 0
    %1328 = vmatpush.bf16.msra.mxu0 0
    %1329 = vmatpush.bf16.msra.mxu0 %v1317
    %1330 = vmatpush.bf16.msra.mxu0 %v1316
    %1331 = vmatpush.bf16.msra.mxu0 %v1315
    %1332 = vmatpush.bf16.msra.mxu0 %v1314
    %1333 = vmatmul.bf16.gmra.mxu0 %v1323
    %v1334 = vpop.f32.mrf.mxu0
    %v1335 = vadd.f32 %v1296, %v1334
    %v1336 = vpop.f32.mrf.mxu0
    %v1337 = vadd.f32 %v1296, %v1336
    %1338 = vdwg.mxu0
    %v1339 = vadd.f32 %v1335, %v1223
    %v1340 = vadd.f32 %v1337, %v1224
    %s1341 = scalar_lea.vmem %s14, 1
    %v1342 = vld [vmem:[%s1341] sm:$0x1]
    %s1343 = scalar_lea.vmem %s15, 1
    %v1344 = vld [vmem:[%s1343] sm:$0x1]
    %v1345 = vsel %vm59, %v1339, 0.0
    %1346 = vadd.xlane.f32.xlu0 %v1345
    %v1347 = vpop.xlane.xlu0 %1346
    %v1348 = vsel %vm59, %v1340, 0.0
    %1349 = vadd.xlane.f32.xlu0 %v1348
    %v1350 = vpop.xlane.xlu0 %1349
    %v1351 = vmul.f32 %v1347, %v72
    %v1352 = vmul.f32 %v1350, %v72
    %v1353 = vsub.f32 %v1339, %v1351
    %v1354 = vsub.f32 %v1340, %v1352
    %v1355 = vmul.f32 %v1353, %v1353
    %v1356 = vmul.f32 %v1354, %v1354
    %v1357 = vsel %vm59, %v1355, 0.0
    %1358 = vadd.xlane.f32.xlu0 %v1357
    %v1359 = vpop.xlane.xlu0 %1358
    %v1360 = vsel %vm59, %v1356, 0.0
    %1361 = vadd.xlane.f32.xlu0 %v1360
    %v1362 = vpop.xlane.xlu0 %1361
    %v1363 = vmul.f32 %v1359, %v72
    %v1364 = vmul.f32 %v1362, %v72
    %v1365 = vadd.f32 %v1363, 1e-12
    %v1366 = vadd.f32 %v1364, 1e-12
    %v1367 = vrsqrt.pop %v1365
    %v1368 = vmul.f32 %v1367, %v1365
    %v1369 = vmul.f32 %v1368, %v1367
    %v1370 = vmul.f32 0.5, %v1369
    %v1371 = vsub.f32 1.5, %v1370
    %v1372 = vmul.f32 %v1367, %v1371
    %vm1373 = vweird.f32 %v1365
    %vm1374 = vweird.f32 %v1367
    %vm1375 = vmor %vm1373, %vm1374
    %v1376 = vsel %vm1375, %v1367, %v1372
    %v1377 = vrsqrt.pop %v1366
    %v1378 = vmul.f32 %v1377, %v1366
    %v1379 = vmul.f32 %v1378, %v1377
    %v1380 = vmul.f32 0.5, %v1379
    %v1381 = vsub.f32 1.5, %v1380
    %v1382 = vmul.f32 %v1377, %v1381
    %vm1383 = vweird.f32 %v1366
    %vm1384 = vweird.f32 %v1377
    %vm1385 = vmor %vm1383, %vm1384
    %v1386 = vsel %vm1385, %v1377, %v1382
    %v1387 = vmul.f32 %v1353, %v1376
    %v1388 = vmul.f32 %v1354, %v1386
    %v1390 = vperm.slane %v1342, 0
    %v1392 = vmul.f32 %v1387, %v1390
    %v1393 = vmul.f32 %v1388, %v1390
    %v1395 = vperm.slane %v1344, 0
    %v1397 = vadd.f32 %v1392, %v1395
    %v1398 = vadd.f32 %v1393, %v1395
    %1399 = vst.msk [vmem:[#allocation3] sm:$0xff] %vm59, %v1397
    %1400 = vst.msk [vmem:[#allocation3 + $0x8] sm:$0xff] %vm59, %v1398
    // Predicated region
    $region66: #{bbqq_forward.1} parent=1 // pred_check
      _
    $region67: #{bbqq_forward.1} parent=1 // pred_check_branch
      %1402 = sbr.rel (0) target = $region69
    $region68: #{bbqq_forward.1} parent=1 // pred_region
      %1404 = vsyncadd [#allocation4], 0
      %s1405 = sshll.u32 [#allocation3], 4
      %s1406 = int_to_ptr.vmem [resolvable:$true] %s1405
      %s1407 = sshll.u32 %s16, 4
      %s1408 = int_to_ptr.hbm [resolvable:$true] %s1407
      %1413 = dma.vmem_to_hbm [thread:$0]  %s1406, 256, %s1408, [#allocation4], 128, 128, 8
    $region69: #{bbqq_forward.1} parent=1 // pred_fallthru
      _
    // Predicated region
    $region70: #{bbqq_forward.1} parent=1 // pred_check
      _
    $region71: #{bbqq_forward.1} parent=1 // pred_check_branch
      %1415 = sbr.rel (0) target = $region73
    $region72: #{bbqq_forward.1} parent=1 // pred_region
      %1417 = dma.done [#allocation4], 256
    $region73: #{bbqq_forward.1} parent=1 // pred_fallthru
      _
    %1418 = vsyncpa [#allocation4], 1

</llo_original>
